<compile_context>
chip_gen: v6e
topology: v6e:2x2x1
jax: 0.10.0
libtpu: 0.0.40
codegen_flags: <defaults>
</compile_context>

<pallas_src>
import functools
import math

import jax
import jax.numpy as jnp
import numpy as np
from jax.experimental import pallas as pl
from jax.experimental.pallas import tpu as pltpu


def _round_up(x, m):
    return (x + m - 1) // m * m


# --------------------------------------------------------------------------
# Fused kernel: all three stages in one pallas_call, no VMEM scratch, no HBM
# round trips between stages.
# --------------------------------------------------------------------------
def _starter_kernel(p1_ref, wc_ref, bc_ref, g1_ref, b1_ref,
                    wde_ref, bde2_ref, g4_ref, b4_ref, wm_ref, bm_ref,
                    o_ref, *, rows, l2, cdp, eps):
    f32, bf16 = jnp.float32, jnp.bfloat16

    # within-batch position of each row -> batch-edge validity for row shifts
    pos = jax.lax.broadcasted_iota(jnp.int32, (rows, cdp), 0) % l2

    def shift_cast(v, s):
        # v shifted by s rows inside each length-l2 batch segment; rows that
        # would cross a batch edge become 0.  The roll runs on the XLU
        # (otherwise idle slot) instead of a VMEM-scratch round trip with
        # misaligned sublane slices; the result is cast once to bf16 for MXU.
        rolled = pltpu.roll(v, (-s) % rows, axis=0)
        valid = jnp.logical_and(pos + s >= 0, pos + s < l2)
        return jnp.where(valid, rolled, 0.0).astype(bf16)

    # ---- stage 1: conv1_1 ++ conv1_2 (one matmul) + bias + ReLU + BN1 ------
    acc1 = jnp.dot(p1_ref[...], wc_ref[...], preferred_element_type=f32)
    acc1 = jnp.maximum(acc1 + bc_ref[...], 0.0)
    mean1 = jnp.mean(acc1, axis=0, keepdims=True)
    d1 = acc1 - mean1
    var1 = jnp.mean(d1 * d1, axis=0, keepdims=True)
    y = d1 * jax.lax.rsqrt(var1 + eps) * g1_ref[...] + b1_ref[...]

    # ---- stage 2: ConvTranspose1d(k=10, s=2, p=4) as ONE fused matmul ------
    # shifted stack (rows, 5*cdp) x combined weight (5*cdp, 2*cdp):
    # output column block 0 = even phase, block 1 = odd phase.
    stack2 = jnp.concatenate(
        [shift_cast(y, -2), shift_cast(y, -1), y.astype(bf16),
         shift_cast(y, 1), shift_cast(y, 2)], axis=1)
    acc2 = jnp.dot(stack2, wde_ref[...], preferred_element_type=f32)
    acc2 = jnp.maximum(acc2 + bde2_ref[...], 0.0)
    ev = acc2[:, :cdp]
    od = acc2[:, cdp:]
    # BN4: statistics over both output phases jointly (= full length axis)
    n_tot = 2.0 * rows
    mean2 = (jnp.sum(ev, axis=0, keepdims=True)
             + jnp.sum(od, axis=0, keepdims=True)) / n_tot
    de, do = ev - mean2, od - mean2
    var2 = (jnp.sum(de * de, axis=0, keepdims=True)
            + jnp.sum(do * do, axis=0, keepdims=True)) / n_tot
    scale2 = jax.lax.rsqrt(var2 + eps) * g4_ref[...]
    ev_n = de * scale2 + b4_ref[...]
    od_n = do * scale2 + b4_ref[...]

    # ---- stage 3: mix conv (k=3, pad=1) as ONE fused matmul ----------------
    # stack = [odd_prev | ev | od | even_next]; output cols [0:cout] = even
    # phase, [cout:2*cout] = odd phase, lane-padded to 128 for dense stores.
    stack3 = jnp.concatenate(
        [shift_cast(od_n, -1), ev_n.astype(bf16), od_n.astype(bf16),
         shift_cast(ev_n, 1)], axis=1)
    out = jnp.dot(stack3, wm_ref[...], preferred_element_type=f32) + bm_ref[...]
    o_ref[...] = out.astype(o_ref.dtype)


# --------------------------------------------------------------------------
# Host-side glue: patch extraction (stage 1 only) and parameter matrices
# --------------------------------------------------------------------------
def _im2col(x, k, stride=1, dilation=1):
    # x: (bs, C, Lp) already padded -> (bs*Lout, C*k); row = b*Lout + l,
    # column = c*k + j
    bs, C, Lp = x.shape
    Lout = (Lp - dilation * (k - 1) - 1) // stride + 1
    idx = stride * jnp.arange(Lout)[:, None] + dilation * jnp.arange(k)[None, :]
    patches = x[:, :, idx]                                    # (bs, C, Lout, k)
    patches = jnp.transpose(patches, (0, 2, 1, 3)).reshape(bs * Lout, C * k)
    return patches, Lout


def precompute_matrices(params, factor, ch, rep):
    """Parameter-only weight assembly (done once, in numpy), lane-padded."""
    c1 = math.floor(9 * factor)
    cd = 2 * c1 * rep
    ig = cd // rep                      # deconv / mix input channels per group
    cout = ch * rep
    cdp = _round_up(cd, 128)            # lane-padded channel width
    outp = _round_up(2 * cout, 128)     # lane-padded (both-phase) output width

    w11 = np.asarray(params["w1_1"], np.float32)   # (c1*rep, 2, 7)
    w12 = np.asarray(params["w1_2"], np.float32)
    b11 = np.asarray(params["b1_1"], np.float32)
    b12 = np.asarray(params["b1_2"], np.float32)
    w_de = np.asarray(params["w_de"], np.float32)  # (cd, ig, 10)
    b_de = np.asarray(params["b_de"], np.float32)
    w_mx = np.asarray(params["w_mix"], np.float32) # (cout, ig, 3)
    b_mx = np.asarray(params["b_mix"], np.float32)

    # stage 1: combined matrix; patch columns = [conv1_1: ic*7+j | conv1_2: ..]
    # output columns already in the torch.cat per-group channel order.
    K1 = 2 * rep * 7
    Wc = np.zeros((2 * K1, cdp), np.float32)
    bc = np.zeros((cdp,), np.float32)
    for g in range(rep):
        col0 = 2 * c1 * g
        for icl in range(2):
            ic = 2 * g + icl
            Wc[ic * 7:(ic + 1) * 7, col0:col0 + c1] = \
                w11[g * c1:(g + 1) * c1, icl, :].T
            Wc[K1 + ic * 7:K1 + (ic + 1) * 7, col0 + c1:col0 + 2 * c1] = \
                w12[g * c1:(g + 1) * c1, icl, :].T
        bc[col0:col0 + c1] = b11[g * c1:(g + 1) * c1]
        bc[col0 + c1:col0 + 2 * c1] = b12[g * c1:(g + 1) * c1]

    # stage 2: one (5*cdp, 2*cdp) weight. Row block i holds shift s = i-2.
    #   even output 2m   : tap 8-2i ;  odd output 2m+1 : tap 9-2i
    Wde = np.zeros((5 * cdp, 2 * cdp), np.float32)
    for i in range(5):
        for g in range(rep):
            r0 = i * cdp + g * ig
            c0 = g * ig
            Wde[r0:r0 + ig, c0:c0 + ig] = w_de[g * ig:(g + 1) * ig, :, 8 - 2 * i]
            Wde[r0:r0 + ig, cdp + c0:cdp + c0 + ig] = \
                w_de[g * ig:(g + 1) * ig, :, 9 - 2 * i]
    bde2 = np.zeros((2 * cdp,), np.float32)
    bde2[:cd] = b_de
    bde2[cdp:cdp + cd] = b_de

    # stage 3: one (4*cdp, outp) weight over [odd_prev | ev | od | even_next];
    # even-phase output in cols [0:cout], odd phase in [cout:2*cout].
    Wm = np.zeros((4 * cdp, outp), np.float32)
    for j in range(3):
        for g in range(rep):
            blk = w_mx[g * ch:(g + 1) * ch, :, j].T        # (ig_in, ch_out)
            r_even = j * cdp + g * ig                      # segs 0,1,2 -> taps
            Wm[r_even:r_even + ig, g * ch:(g + 1) * ch] = blk
            r_odd = (j + 1) * cdp + g * ig                 # segs 1,2,3 -> taps
            Wm[r_odd:r_odd + ig, cout + g * ch:cout + (g + 1) * ch] = blk
    bm = np.zeros((outp,), np.float32)
    bm[:cout] = b_mx
    bm[cout:2 * cout] = b_mx

    pad1 = lambda v: np.pad(np.asarray(v, np.float32), (0, cdp - cd))
    bf16, f32 = jnp.bfloat16, jnp.float32
    return dict(
        Wc=jnp.asarray(Wc, bf16),
        bc=jnp.asarray(bc, f32).reshape(1, cdp),
        g1=jnp.asarray(pad1(params["bn1_g"]), f32).reshape(1, cdp),
        b1=jnp.asarray(pad1(params["bn1_b"]), f32).reshape(1, cdp),
        Wde=jnp.asarray(Wde, bf16),
        bde2=jnp.asarray(bde2, f32).reshape(1, 2 * cdp),
        g4=jnp.asarray(pad1(params["bn4_g"]), f32).reshape(1, cdp),
        b4=jnp.asarray(pad1(params["bn4_b"]), f32).reshape(1, cdp),
        Wm=jnp.asarray(Wm, bf16),
        bm=jnp.asarray(bm, f32).reshape(1, outp),
    )


@functools.partial(jax.jit, static_argnames=("factor", "ch", "rep"))
def starter_block_forward(mats, x, *, factor, ch, rep):
    bs, cin, N = x.shape
    c1 = math.floor(9 * factor)
    cd = 2 * c1 * rep
    cout = ch * rep
    cdp = _round_up(cd, 128)
    outp = _round_up(2 * cout, 128)
    assert cin == 2 * rep and N % 2 == 0
    L2 = N // 2
    rows = bs * L2

    # stage-1 patch extraction (circular pad + stride-2 windows) stays in XLA:
    # the raw input is tiny and everything downstream lives in VMEM.
    xp1 = jnp.concatenate([x[..., -3:], x, x[..., :3]], axis=-1)
    xp2 = jnp.concatenate([x[..., -6:], x, x[..., :6]], axis=-1)
    p1, l1 = _im2col(xp1, 7, stride=2, dilation=1)
    p2, l2_ = _im2col(xp2, 7, stride=2, dilation=2)
    assert l1 == L2 and l2_ == L2
    p1cat = jnp.concatenate([p1, p2], axis=1).astype(jnp.bfloat16)  # (rows, 56)

    kern = functools.partial(_starter_kernel, rows=rows, l2=L2, cdp=cdp,
                             eps=1e-5)
    operands = (p1cat, mats["Wc"], mats["bc"], mats["g1"], mats["b1"],
                mats["Wde"], mats["bde2"], mats["g4"], mats["b4"],
                mats["Wm"], mats["bm"])
    in_specs = [pl.BlockSpec(a.shape, lambda i, nd=a.ndim: (0,) * nd)
                for a in operands]

    # explicit VMEM budget: double-buffered operands + output + headroom for
    # the in-register stage intermediates (~5 KiB per row) that may spill.
    io_bytes = sum(int(np.prod(a.shape)) * a.dtype.itemsize for a in operands)
    out_bytes = rows * outp * 4
    vmem_limit = int(min(110 << 20,
                         2 * (io_bytes + out_bytes) + rows * 8192 + (4 << 20)))

    out = pl.pallas_call(
        kern,
        out_shape=jax.ShapeDtypeStruct((rows, outp), jnp.float32),
        grid=(1,),
        in_specs=in_specs,
        out_specs=pl.BlockSpec((rows, outp), lambda i: (0, 0)),
        compiler_params=pltpu.CompilerParams(
            dimension_semantics=("arbitrary",),
            vmem_limit_bytes=vmem_limit),
    )(*operands)

    # de-interleave the two output phases back into the PyTorch NCW layout
    out = out[:, :2 * cout].reshape(bs, L2, 2, cout)
    return out.transpose(0, 3, 1, 2).reshape(bs, cout, N)


# --------------------------------------------------------------------------
# Parameters and a PyTorch-faithful reference (lax.conv based)
# --------------------------------------------------------------------------
def init_params(key, factor, ch, rep):
    c1 = math.floor(9 * factor)
    cd = 2 * c1 * rep
    ks = jax.random.split(key, 8)
    p = {}
    p["w1_1"] = 0.1 * jax.random.normal(ks[0], (c1 * rep, 2, 7), jnp.float32)
    p["b1_1"] = 0.1 * jax.random.normal(ks[1], (c1 * rep,), jnp.float32)
    p["w1_2"] = 0.1 * jax.random.normal(ks[2], (c1 * rep, 2, 7), jnp.float32)
    p["b1_2"] = 0.1 * jax.random.normal(ks[3], (c1 * rep,), jnp.float32)
    p["w_de"] = 0.1 * jax.random.normal(ks[4], (cd, cd // rep, 10), jnp.float32)
    p["b_de"] = 0.1 * jax.random.normal(ks[5], (cd,), jnp.float32)
    p["w_mix"] = 0.1 * jax.random.normal(ks[6], (ch * rep, cd // rep, 3), jnp.float32)
    p["b_mix"] = 0.1 * jax.random.normal(ks[7], (ch * rep,), jnp.float32)
    p["bn1_g"] = jnp.ones((cd,), jnp.float32)
    p["bn1_b"] = jnp.zeros((cd,), jnp.float32)
    p["bn4_g"] = jnp.ones((cd,), jnp.float32)
    p["bn4_b"] = jnp.zeros((cd,), jnp.float32)
    return p


def _bn_train(x, gamma, beta, eps=1e-5):
    mean = jnp.mean(x, axis=(0, 2), keepdims=True)
    var = jnp.mean((x - mean) ** 2, axis=(0, 2), keepdims=True)
    return (x - mean) / jnp.sqrt(var + eps) * gamma[None, :, None] + beta[None, :, None]


def reference_forward(params, x, *, factor, ch, rep, compute_dtype=jnp.float32):
    """PyTorch-faithful reference built on lax.conv_general_dilated."""
    bs, _, N = x.shape
    c1 = math.floor(9 * factor)
    cd = 2 * c1 * rep
    ig = cd // rep
    dn = ("NCH", "OIH", "NCH")
    f32 = jnp.float32
    cast = lambda a: a.astype(compute_dtype)

    def conv(lhs, rhs, stride, padding, rhs_dil=1, lhs_dil=1, groups=1):
        return jax.lax.conv_general_dilated(
            cast(lhs), cast(rhs), window_strides=(stride,), padding=padding,
            lhs_dilation=(lhs_dil,), rhs_dilation=(rhs_dil,),
            dimension_numbers=dn, feature_group_count=groups,
            preferred_element_type=f32)

    xp1 = jnp.concatenate([x[..., -3:], x, x[..., :3]], axis=-1)
    xp2 = jnp.concatenate([x[..., -6:], x, x[..., :6]], axis=-1)
    o11 = conv(xp1, params["w1_1"], 2, "VALID", groups=rep) + params["b1_1"][None, :, None]
    o12 = conv(xp2, params["w1_2"], 2, "VALID", rhs_dil=2, groups=rep) + params["b1_2"][None, :, None]
    o11 = jnp.maximum(o11, 0.0)
    o12 = jnp.maximum(o12, 0.0)
    L2 = o11.shape[-1]
    out = jnp.concatenate([o11.reshape(bs, rep, c1, L2),
                           o12.reshape(bs, rep, c1, L2)], axis=2).reshape(bs, cd, L2)
    out = _bn_train(out, params["bn1_g"], params["bn1_b"])

    # ConvTranspose1d(k=10, s=2, p=4, groups=rep) == lhs-dilated conv with the
    # flipped, channel-swapped kernel.
    w_t = params["w_de"]                                   # (cd, ig, 10)
    w_e = w_t.reshape(rep, ig, ig, 10).transpose(0, 2, 1, 3)[..., ::-1].reshape(cd, ig, 10)
    o2 = conv(out, w_e, 1, [(5, 5)], lhs_dil=2, groups=rep) + params["b_de"][None, :, None]
    o2 = jnp.maximum(o2, 0.0)
    o2 = _bn_train(o2, params["bn4_g"], params["bn4_b"])

    o3 = conv(o2, params["w_mix"], 1, [(1, 1)], groups=rep) + params["b_mix"][None, :, None]
    return o3


if __name__ == "__main__":
    factor, ch, rep = 1, 3, 2          # conv1_out_ch = 9, deconv channels = 36
    bs, N = 2, 16
    key = jax.random.PRNGKey(0)
    kx, kp = jax.random.split(key)
    x = jax.random.normal(kx, (bs, 2 * rep, N), jnp.float32)   # PyTorch NCW input
    params = init_params(kp, factor, ch, rep)
    mats = precompute_matrices(params, factor, ch, rep)

    out = starter_block_forward(mats, x, factor=factor, ch=ch, rep=rep)
    out = jax.block_until_ready(out)

    assert out.shape == (bs, ch * rep, N), out.shape
    out_np = np.asarray(out)
    assert np.all(np.isfinite(out_np))

    # reference with the same mixed-precision policy (bf16 operands, f32 acc)
    ref_bf16 = np.asarray(reference_forward(params, x, factor=factor, ch=ch,
                                            rep=rep, compute_dtype=jnp.bfloat16))
    assert np.allclose(out_np, ref_bf16, atol=2e-2, rtol=2e-2), \
        float(np.max(np.abs(out_np - ref_bf16)))

    # loose sanity check against the full-f32 PyTorch-faithful reference
    ref_f32 = np.asarray(reference_forward(params, x, factor=factor, ch=ch,
                                           rep=rep, compute_dtype=jnp.float32))
    rel = np.linalg.norm(out_np - ref_f32) / (np.linalg.norm(ref_f32) + 1e-12)
    assert rel < 0.1, rel

    print("KERNEL_OK")
</pallas_src>

<mosaic_0001>
module attributes {stable_mosaic.version = 11 : i64} {
  func.func @_starter_kernel(%arg0: i32, %arg1: memref<16x56xbf16, #tpu.memory_space<vmem>>, %arg2: memref<56x128xbf16, #tpu.memory_space<vmem>>, %arg3: memref<1x128xf32, #tpu.memory_space<vmem>>, %arg4: memref<1x128xf32, #tpu.memory_space<vmem>>, %arg5: memref<1x128xf32, #tpu.memory_space<vmem>>, %arg6: memref<640x256xbf16, #tpu.memory_space<vmem>>, %arg7: memref<1x256xf32, #tpu.memory_space<vmem>>, %arg8: memref<1x128xf32, #tpu.memory_space<vmem>>, %arg9: memref<1x128xf32, #tpu.memory_space<vmem>>, %arg10: memref<512x128xbf16, #tpu.memory_space<vmem>>, %arg11: memref<1x128xf32, #tpu.memory_space<vmem>>, %arg12: memref<16x128xf32, #tpu.memory_space<vmem>>) attributes {dimension_semantics = [#tpu.dimension_semantics<arbitrary>], iteration_bounds = array<i64: 1>, scalar_prefetch = 0 : i64, scratch_operands = 0 : i64, tpu.core_type = #tpu.core_type<tc>, window_params = [{pipeline_mode = #tpu.pipeline_mode<synchronous>, transform_indices = @transform_0, window_bounds = array<i64: 16, 56>}, {pipeline_mode = #tpu.pipeline_mode<synchronous>, transform_indices = @transform_1, window_bounds = array<i64: 56, 128>}, {pipeline_mode = #tpu.pipeline_mode<synchronous>, transform_indices = @transform_2, window_bounds = array<i64: 1, 128>}, {pipeline_mode = #tpu.pipeline_mode<synchronous>, transform_indices = @transform_3, window_bounds = array<i64: 1, 128>}, {pipeline_mode = #tpu.pipeline_mode<synchronous>, transform_indices = @transform_4, window_bounds = array<i64: 1, 128>}, {pipeline_mode = #tpu.pipeline_mode<synchronous>, transform_indices = @transform_5, window_bounds = array<i64: 640, 256>}, {pipeline_mode = #tpu.pipeline_mode<synchronous>, transform_indices = @transform_6, window_bounds = array<i64: 1, 256>}, {pipeline_mode = #tpu.pipeline_mode<synchronous>, transform_indices = @transform_7, window_bounds = array<i64: 1, 128>}, {pipeline_mode = #tpu.pipeline_mode<synchronous>, transform_indices = @transform_8, window_bounds = array<i64: 1, 128>}, {pipeline_mode = #tpu.pipeline_mode<synchronous>, transform_indices = @transform_9, window_bounds = array<i64: 512, 128>}, {pipeline_mode = #tpu.pipeline_mode<synchronous>, transform_indices = @transform_10, window_bounds = array<i64: 1, 128>}, {pipeline_mode = #tpu.pipeline_mode<synchronous>, transform_indices = @transform_11, window_bounds = array<i64: 16, 128>}]} {
    %0 = tpu.iota {dimensions = array<i32: 0>} : vector<16x128xi32>
    %c8_i32 = arith.constant 8 : i32
    %c0_i32 = arith.constant 0 : i32
    %1 = arith.cmpi eq, %c8_i32, %c0_i32 : i32
    %c1_i32 = arith.constant 1 : i32
    %2 = arith.select %1, %c1_i32, %c8_i32 : i32
    %3 = vector.broadcast %2 : i32 to vector<16x128xi32>
    %4 = arith.remsi %0, %3 : vector<16x128xi32>
    %c0_i32_0 = arith.constant 0 : i32
    %5 = vector.broadcast %c0_i32_0 : i32 to vector<16x128xi32>
    %6 = arith.cmpi ne, %4, %5 : vector<16x128xi32>
    %c0_i32_1 = arith.constant 0 : i32
    %7 = vector.broadcast %c0_i32_1 : i32 to vector<16x128xi32>
    %8 = arith.cmpi slt, %4, %7 : vector<16x128xi32>
    %c0_i32_2 = arith.constant 0 : i32
    %9 = arith.cmpi slt, %2, %c0_i32_2 : i32
    %10 = vector.broadcast %9 : i1 to vector<16x128xi1>
    %11 = vector.broadcast %10 : vector<16x128xi1> to vector<16x128xi1>
    %12 = arith.xori %8, %11 : vector<16x128xi1>
    %13 = arith.andi %12, %6 : vector<16x128xi1>
    %14 = vector.broadcast %2 : i32 to vector<16x128xi32>
    %15 = arith.addi %4, %14 : vector<16x128xi32>
    %16 = arith.select %13, %15, %4 : vector<16x128xi1>, vector<16x128xi32>
    %c0 = arith.constant 0 : index
    %c0_3 = arith.constant 0 : index
    %17 = vector.load %arg1[%c0, %c0_3] : memref<16x56xbf16, #tpu.memory_space<vmem>>, vector<16x56xbf16>
    %c0_4 = arith.constant 0 : index
    %c0_5 = arith.constant 0 : index
    %18 = vector.load %arg2[%c0_4, %c0_5] : memref<56x128xbf16, #tpu.memory_space<vmem>>, vector<56x128xbf16>
    %cst = arith.constant dense<0.000000e+00> : vector<16x128xf32>
    %19 = tpu.matmul %17, %18, %cst {dimension_numbers = #tpu.dot_dimension_numbers<[1], [0], [0], [1], [0, 0, 1, 1], [], []>} : vector<16x56xbf16>, vector<56x128xbf16>, vector<16x128xf32> -> vector<16x128xf32>
    %c0_6 = arith.constant 0 : index
    %c0_7 = arith.constant 0 : index
    %20 = vector.load %arg3[%c0_6, %c0_7] : memref<1x128xf32, #tpu.memory_space<vmem>>, vector<1x128xf32>
    %21 = vector.broadcast %20 : vector<1x128xf32> to vector<16x128xf32>
    %22 = arith.addf %19, %21 : vector<16x128xf32>
    %cst_8 = arith.constant 0.000000e+00 : f32
    %23 = vector.broadcast %cst_8 : f32 to vector<16x128xf32>
    %24 = arith.maximumf %22, %23 : vector<16x128xf32>
    %cst_9 = arith.constant dense<0.000000e+00> : vector<128xf32>
    %25 = vector.multi_reduction <add>, %24, %cst_9 [0] : vector<16x128xf32> to vector<128xf32>
    %26 = vector.shape_cast %25 : vector<128xf32> to vector<1x128xf32>
    %cst_10 = arith.constant 1.600000e+01 : f32
    %27 = vector.broadcast %cst_10 : f32 to vector<1x128xf32>
    %28 = arith.divf %26, %27 : vector<1x128xf32>
    %29 = vector.broadcast %28 : vector<1x128xf32> to vector<16x128xf32>
    %30 = arith.subf %24, %29 : vector<16x128xf32>
    %31 = arith.mulf %30, %30 : vector<16x128xf32>
    %cst_11 = arith.constant dense<0.000000e+00> : vector<128xf32>
    %32 = vector.multi_reduction <add>, %31, %cst_11 [0] : vector<16x128xf32> to vector<128xf32>
    %33 = vector.shape_cast %32 : vector<128xf32> to vector<1x128xf32>
    %cst_12 = arith.constant 1.600000e+01 : f32
    %34 = vector.broadcast %cst_12 : f32 to vector<1x128xf32>
    %35 = arith.divf %33, %34 : vector<1x128xf32>
    %cst_13 = arith.constant 9.99999974E-6 : f32
    %36 = vector.broadcast %cst_13 : f32 to vector<1x128xf32>
    %37 = arith.addf %35, %36 : vector<1x128xf32>
    %38 = math.rsqrt %37 : vector<1x128xf32>
    %39 = vector.broadcast %38 : vector<1x128xf32> to vector<16x128xf32>
    %40 = arith.mulf %30, %39 : vector<16x128xf32>
    %c0_14 = arith.constant 0 : index
    %c0_15 = arith.constant 0 : index
    %41 = vector.load %arg4[%c0_14, %c0_15] : memref<1x128xf32, #tpu.memory_space<vmem>>, vector<1x128xf32>
    %42 = vector.broadcast %41 : vector<1x128xf32> to vector<16x128xf32>
    %43 = arith.mulf %40, %42 : vector<16x128xf32>
    %c0_16 = arith.constant 0 : index
    %c0_17 = arith.constant 0 : index
    %44 = vector.load %arg5[%c0_16, %c0_17] : memref<1x128xf32, #tpu.memory_space<vmem>>, vector<1x128xf32>
    %45 = vector.broadcast %44 : vector<1x128xf32> to vector<16x128xf32>
    %46 = arith.addf %43, %45 : vector<16x128xf32>
    %c2_i32 = arith.constant 2 : i32
    %47 = tpu.dynamic_rotate %46 by %c2_i32 dim 0 : vector<16x128xf32>, i32 -> vector<16x128xf32>
    %c-2_i32 = arith.constant -2 : i32
    %48 = vector.broadcast %c-2_i32 : i32 to vector<16x128xi32>
    %49 = arith.addi %16, %48 : vector<16x128xi32>
    %c0_i32_18 = arith.constant 0 : i32
    %50 = vector.broadcast %c0_i32_18 : i32 to vector<16x128xi32>
    %51 = arith.cmpi sge, %49, %50 : vector<16x128xi32>
    %c-2_i32_19 = arith.constant -2 : i32
    %52 = vector.broadcast %c-2_i32_19 : i32 to vector<16x128xi32>
    %53 = arith.addi %16, %52 : vector<16x128xi32>
    %c8_i32_20 = arith.constant 8 : i32
    %54 = vector.broadcast %c8_i32_20 : i32 to vector<16x128xi32>
    %55 = arith.cmpi slt, %53, %54 : vector<16x128xi32>
    %56 = arith.andi %51, %55 : vector<16x128xi1>
    %cst_21 = arith.constant 0.000000e+00 : f32
    %57 = vector.broadcast %cst_21 : f32 to vector<16x128xf32>
    %58 = arith.select %56, %47, %57 : vector<16x128xi1>, vector<16x128xf32>
    %59 = arith.truncf %58 : vector<16x128xf32> to vector<16x128xbf16>
    %c1_i32_22 = arith.constant 1 : i32
    %60 = tpu.dynamic_rotate %46 by %c1_i32_22 dim 0 : vector<16x128xf32>, i32 -> vector<16x128xf32>
    %c-1_i32 = arith.constant -1 : i32
    %61 = vector.broadcast %c-1_i32 : i32 to vector<16x128xi32>
    %62 = arith.addi %16, %61 : vector<16x128xi32>
    %c0_i32_23 = arith.constant 0 : i32
    %63 = vector.broadcast %c0_i32_23 : i32 to vector<16x128xi32>
    %64 = arith.cmpi sge, %62, %63 : vector<16x128xi32>
    %c-1_i32_24 = arith.constant -1 : i32
    %65 = vector.broadcast %c-1_i32_24 : i32 to vector<16x128xi32>
    %66 = arith.addi %16, %65 : vector<16x128xi32>
    %c8_i32_25 = arith.constant 8 : i32
    %67 = vector.broadcast %c8_i32_25 : i32 to vector<16x128xi32>
    %68 = arith.cmpi slt, %66, %67 : vector<16x128xi32>
    %69 = arith.andi %64, %68 : vector<16x128xi1>
    %cst_26 = arith.constant 0.000000e+00 : f32
    %70 = vector.broadcast %cst_26 : f32 to vector<16x128xf32>
    %71 = arith.select %69, %60, %70 : vector<16x128xi1>, vector<16x128xf32>
    %72 = arith.truncf %71 : vector<16x128xf32> to vector<16x128xbf16>
    %73 = arith.truncf %46 : vector<16x128xf32> to vector<16x128xbf16>
    %c15_i32 = arith.constant 15 : i32
    %74 = tpu.dynamic_rotate %46 by %c15_i32 dim 0 : vector<16x128xf32>, i32 -> vector<16x128xf32>
    %c1_i32_27 = arith.constant 1 : i32
    %75 = vector.broadcast %c1_i32_27 : i32 to vector<16x128xi32>
    %76 = arith.addi %16, %75 : vector<16x128xi32>
    %c0_i32_28 = arith.constant 0 : i32
    %77 = vector.broadcast %c0_i32_28 : i32 to vector<16x128xi32>
    %78 = arith.cmpi sge, %76, %77 : vector<16x128xi32>
    %c1_i32_29 = arith.constant 1 : i32
    %79 = vector.broadcast %c1_i32_29 : i32 to vector<16x128xi32>
    %80 = arith.addi %16, %79 : vector<16x128xi32>
    %c8_i32_30 = arith.constant 8 : i32
    %81 = vector.broadcast %c8_i32_30 : i32 to vector<16x128xi32>
    %82 = arith.cmpi slt, %80, %81 : vector<16x128xi32>
    %83 = arith.andi %78, %82 : vector<16x128xi1>
    %cst_31 = arith.constant 0.000000e+00 : f32
    %84 = vector.broadcast %cst_31 : f32 to vector<16x128xf32>
    %85 = arith.select %83, %74, %84 : vector<16x128xi1>, vector<16x128xf32>
    %86 = arith.truncf %85 : vector<16x128xf32> to vector<16x128xbf16>
    %c14_i32 = arith.constant 14 : i32
    %87 = tpu.dynamic_rotate %46 by %c14_i32 dim 0 : vector<16x128xf32>, i32 -> vector<16x128xf32>
    %c2_i32_32 = arith.constant 2 : i32
    %88 = vector.broadcast %c2_i32_32 : i32 to vector<16x128xi32>
    %89 = arith.addi %16, %88 : vector<16x128xi32>
    %c0_i32_33 = arith.constant 0 : i32
    %90 = vector.broadcast %c0_i32_33 : i32 to vector<16x128xi32>
    %91 = arith.cmpi sge, %89, %90 : vector<16x128xi32>
    %c2_i32_34 = arith.constant 2 : i32
    %92 = vector.broadcast %c2_i32_34 : i32 to vector<16x128xi32>
    %93 = arith.addi %16, %92 : vector<16x128xi32>
    %c8_i32_35 = arith.constant 8 : i32
    %94 = vector.broadcast %c8_i32_35 : i32 to vector<16x128xi32>
    %95 = arith.cmpi slt, %93, %94 : vector<16x128xi32>
    %96 = arith.andi %91, %95 : vector<16x128xi1>
    %cst_36 = arith.constant 0.000000e+00 : f32
    %97 = vector.broadcast %cst_36 : f32 to vector<16x128xf32>
    %98 = arith.select %96, %87, %97 : vector<16x128xi1>, vector<16x128xf32>
    %99 = arith.truncf %98 : vector<16x128xf32> to vector<16x128xbf16>
    %100 = tpu.concatenate %59, %72, %73, %86, %99 in 1 : vector<16x128xbf16>, vector<16x128xbf16>, vector<16x128xbf16>, vector<16x128xbf16>, vector<16x128xbf16> -> vector<16x640xbf16>
    %c0_37 = arith.constant 0 : index
    %c0_38 = arith.constant 0 : index
    %101 = vector.load %arg6[%c0_37, %c0_38] : memref<640x256xbf16, #tpu.memory_space<vmem>>, vector<640x256xbf16>
    %cst_39 = arith.constant dense<0.000000e+00> : vector<16x256xf32>
    %102 = tpu.matmul %100, %101, %cst_39 {dimension_numbers = #tpu.dot_dimension_numbers<[1], [0], [0], [1], [0, 0, 1, 1], [], []>} : vector<16x640xbf16>, vector<640x256xbf16>, vector<16x256xf32> -> vector<16x256xf32>
    %c0_40 = arith.constant 0 : index
    %c0_41 = arith.constant 0 : index
    %103 = vector.load %arg7[%c0_40, %c0_41] : memref<1x256xf32, #tpu.memory_space<vmem>>, vector<1x256xf32>
    %104 = vector.broadcast %103 : vector<1x256xf32> to vector<16x256xf32>
    %105 = arith.addf %102, %104 : vector<16x256xf32>
    %cst_42 = arith.constant 0.000000e+00 : f32
    %106 = vector.broadcast %cst_42 : f32 to vector<16x256xf32>
    %107 = arith.maximumf %105, %106 : vector<16x256xf32>
    %108 = vector.extract_strided_slice %107 {offsets = [0, 0], sizes = [16, 128], strides = [1, 1]} : vector<16x256xf32> to vector<16x128xf32>
    %109 = vector.extract_strided_slice %107 {offsets = [0, 128], sizes = [16, 128], strides = [1, 1]} : vector<16x256xf32> to vector<16x128xf32>
    %cst_43 = arith.constant dense<0.000000e+00> : vector<128xf32>
    %110 = vector.multi_reduction <add>, %108, %cst_43 [0] : vector<16x128xf32> to vector<128xf32>
    %111 = vector.shape_cast %110 : vector<128xf32> to vector<1x128xf32>
    %cst_44 = arith.constant dense<0.000000e+00> : vector<128xf32>
    %112 = vector.multi_reduction <add>, %109, %cst_44 [0] : vector<16x128xf32> to vector<128xf32>
    %113 = vector.shape_cast %112 : vector<128xf32> to vector<1x128xf32>
    %114 = arith.addf %111, %113 : vector<1x128xf32>
    %cst_45 = arith.constant 3.200000e+01 : f32
    %115 = vector.broadcast %cst_45 : f32 to vector<1x128xf32>
    %116 = arith.divf %114, %115 : vector<1x128xf32>
    %117 = vector.broadcast %116 : vector<1x128xf32> to vector<16x128xf32>
    %118 = arith.subf %108, %117 : vector<16x128xf32>
    %119 = vector.broadcast %116 : vector<1x128xf32> to vector<16x128xf32>
    %120 = arith.subf %109, %119 : vector<16x128xf32>
    %121 = arith.mulf %118, %118 : vector<16x128xf32>
    %cst_46 = arith.constant dense<0.000000e+00> : vector<128xf32>
    %122 = vector.multi_reduction <add>, %121, %cst_46 [0] : vector<16x128xf32> to vector<128xf32>
    %123 = vector.shape_cast %122 : vector<128xf32> to vector<1x128xf32>
    %124 = arith.mulf %120, %120 : vector<16x128xf32>
    %cst_47 = arith.constant dense<0.000000e+00> : vector<128xf32>
    %125 = vector.multi_reduction <add>, %124, %cst_47 [0] : vector<16x128xf32> to vector<128xf32>
    %126 = vector.shape_cast %125 : vector<128xf32> to vector<1x128xf32>
    %127 = arith.addf %123, %126 : vector<1x128xf32>
    %cst_48 = arith.constant 3.200000e+01 : f32
    %128 = vector.broadcast %cst_48 : f32 to vector<1x128xf32>
    %129 = arith.divf %127, %128 : vector<1x128xf32>
    %cst_49 = arith.constant 9.99999974E-6 : f32
    %130 = vector.broadcast %cst_49 : f32 to vector<1x128xf32>
    %131 = arith.addf %129, %130 : vector<1x128xf32>
    %132 = math.rsqrt %131 : vector<1x128xf32>
    %c0_50 = arith.constant 0 : index
    %c0_51 = arith.constant 0 : index
    %133 = vector.load %arg8[%c0_50, %c0_51] : memref<1x128xf32, #tpu.memory_space<vmem>>, vector<1x128xf32>
    %134 = arith.mulf %132, %133 : vector<1x128xf32>
    %135 = vector.broadcast %134 : vector<1x128xf32> to vector<16x128xf32>
    %136 = arith.mulf %118, %135 : vector<16x128xf32>
    %c0_52 = arith.constant 0 : index
    %c0_53 = arith.constant 0 : index
    %137 = vector.load %arg9[%c0_52, %c0_53] : memref<1x128xf32, #tpu.memory_space<vmem>>, vector<1x128xf32>
    %138 = vector.broadcast %137 : vector<1x128xf32> to vector<16x128xf32>
    %139 = arith.addf %136, %138 : vector<16x128xf32>
    %140 = vector.broadcast %134 : vector<1x128xf32> to vector<16x128xf32>
    %141 = arith.mulf %120, %140 : vector<16x128xf32>
    %c0_54 = arith.constant 0 : index
    %c0_55 = arith.constant 0 : index
    %142 = vector.load %arg9[%c0_54, %c0_55] : memref<1x128xf32, #tpu.memory_space<vmem>>, vector<1x128xf32>
    %143 = vector.broadcast %142 : vector<1x128xf32> to vector<16x128xf32>
    %144 = arith.addf %141, %143 : vector<16x128xf32>
    %c1_i32_56 = arith.constant 1 : i32
    %145 = tpu.dynamic_rotate %144 by %c1_i32_56 dim 0 : vector<16x128xf32>, i32 -> vector<16x128xf32>
    %c-1_i32_57 = arith.constant -1 : i32
    %146 = vector.broadcast %c-1_i32_57 : i32 to vector<16x128xi32>
    %147 = arith.addi %16, %146 : vector<16x128xi32>
    %c0_i32_58 = arith.constant 0 : i32
    %148 = vector.broadcast %c0_i32_58 : i32 to vector<16x128xi32>
    %149 = arith.cmpi sge, %147, %148 : vector<16x128xi32>
    %c-1_i32_59 = arith.constant -1 : i32
    %150 = vector.broadcast %c-1_i32_59 : i32 to vector<16x128xi32>
    %151 = arith.addi %16, %150 : vector<16x128xi32>
    %c8_i32_60 = arith.constant 8 : i32
    %152 = vector.broadcast %c8_i32_60 : i32 to vector<16x128xi32>
    %153 = arith.cmpi slt, %151, %152 : vector<16x128xi32>
    %154 = arith.andi %149, %153 : vector<16x128xi1>
    %cst_61 = arith.constant 0.000000e+00 : f32
    %155 = vector.broadcast %cst_61 : f32 to vector<16x128xf32>
    %156 = arith.select %154, %145, %155 : vector<16x128xi1>, vector<16x128xf32>
    %157 = arith.truncf %156 : vector<16x128xf32> to vector<16x128xbf16>
    %158 = arith.truncf %139 : vector<16x128xf32> to vector<16x128xbf16>
    %159 = arith.truncf %144 : vector<16x128xf32> to vector<16x128xbf16>
    %c15_i32_62 = arith.constant 15 : i32
    %160 = tpu.dynamic_rotate %139 by %c15_i32_62 dim 0 : vector<16x128xf32>, i32 -> vector<16x128xf32>
    %c1_i32_63 = arith.constant 1 : i32
    %161 = vector.broadcast %c1_i32_63 : i32 to vector<16x128xi32>
    %162 = arith.addi %16, %161 : vector<16x128xi32>
    %c0_i32_64 = arith.constant 0 : i32
    %163 = vector.broadcast %c0_i32_64 : i32 to vector<16x128xi32>
    %164 = arith.cmpi sge, %162, %163 : vector<16x128xi32>
    %c1_i32_65 = arith.constant 1 : i32
    %165 = vector.broadcast %c1_i32_65 : i32 to vector<16x128xi32>
    %166 = arith.addi %16, %165 : vector<16x128xi32>
    %c8_i32_66 = arith.constant 8 : i32
    %167 = vector.broadcast %c8_i32_66 : i32 to vector<16x128xi32>
    %168 = arith.cmpi slt, %166, %167 : vector<16x128xi32>
    %169 = arith.andi %164, %168 : vector<16x128xi1>
    %cst_67 = arith.constant 0.000000e+00 : f32
    %170 = vector.broadcast %cst_67 : f32 to vector<16x128xf32>
    %171 = arith.select %169, %160, %170 : vector<16x128xi1>, vector<16x128xf32>
    %172 = arith.truncf %171 : vector<16x128xf32> to vector<16x128xbf16>
    %173 = tpu.concatenate %157, %158, %159, %172 in 1 : vector<16x128xbf16>, vector<16x128xbf16>, vector<16x128xbf16>, vector<16x128xbf16> -> vector<16x512xbf16>
    %c0_68 = arith.constant 0 : index
    %c0_69 = arith.constant 0 : index
    %174 = vector.load %arg10[%c0_68, %c0_69] : memref<512x128xbf16, #tpu.memory_space<vmem>>, vector<512x128xbf16>
    %cst_70 = arith.constant dense<0.000000e+00> : vector<16x128xf32>
    %175 = tpu.matmul %173, %174, %cst_70 {dimension_numbers = #tpu.dot_dimension_numbers<[1], [0], [0], [1], [0, 0, 1, 1], [], []>} : vector<16x512xbf16>, vector<512x128xbf16>, vector<16x128xf32> -> vector<16x128xf32>
    %c0_71 = arith.constant 0 : index
    %c0_72 = arith.constant 0 : index
    %176 = vector.load %arg11[%c0_71, %c0_72] : memref<1x128xf32, #tpu.memory_space<vmem>>, vector<1x128xf32>
    %177 = vector.broadcast %176 : vector<1x128xf32> to vector<16x128xf32>
    %178 = arith.addf %175, %177 : vector<16x128xf32>
    %c0_73 = arith.constant 0 : index
    %c0_74 = arith.constant 0 : index
    %179 = vector.load %arg12[%c0_73, %c0_74] : memref<16x128xf32, #tpu.memory_space<vmem>>, vector<16x128xf32>
    tpu.vector_store %arg12[%c0_73, %c0_74], %178 {strides = array<i32>} : memref<16x128xf32, #tpu.memory_space<vmem>>, vector<16x128xf32>,
    return
  }
  func.func @transform_0(%arg0: i32) -> (i32, i32) {
    %c0_i32 = arith.constant 0 : i32
    %c0_i32_0 = arith.constant 0 : i32
    %c0_i32_1 = arith.constant 0 : i32
    return %c0_i32, %c0_i32_0 : i32, i32
  }
  func.func @transform_1(%arg0: i32) -> (i32, i32) {
    %c0_i32 = arith.constant 0 : i32
    %c0_i32_0 = arith.constant 0 : i32
    %c0_i32_1 = arith.constant 0 : i32
    return %c0_i32, %c0_i32_0 : i32, i32
  }
  func.func @transform_2(%arg0: i32) -> (i32, i32) {
    %c0_i32 = arith.constant 0 : i32
    %c0_i32_0 = arith.constant 0 : i32
    %c0_i32_1 = arith.constant 0 : i32
    return %c0_i32, %c0_i32_0 : i32, i32
  }
  func.func @transform_3(%arg0: i32) -> (i32, i32) {
    %c0_i32 = arith.constant 0 : i32
    %c0_i32_0 = arith.constant 0 : i32
    %c0_i32_1 = arith.constant 0 : i32
    return %c0_i32, %c0_i32_0 : i32, i32
  }
  func.func @transform_4(%arg0: i32) -> (i32, i32) {
    %c0_i32 = arith.constant 0 : i32
    %c0_i32_0 = arith.constant 0 : i32
    %c0_i32_1 = arith.constant 0 : i32
    return %c0_i32, %c0_i32_0 : i32, i32
  }
  func.func @transform_5(%arg0: i32) -> (i32, i32) {
    %c0_i32 = arith.constant 0 : i32
    %c0_i32_0 = arith.constant 0 : i32
    %c0_i32_1 = arith.constant 0 : i32
    return %c0_i32, %c0_i32_0 : i32, i32
  }
  func.func @transform_6(%arg0: i32) -> (i32, i32) {
    %c0_i32 = arith.constant 0 : i32
    %c0_i32_0 = arith.constant 0 : i32
    %c0_i32_1 = arith.constant 0 : i32
    return %c0_i32, %c0_i32_0 : i32, i32
  }
  func.func @transform_7(%arg0: i32) -> (i32, i32) {
    %c0_i32 = arith.constant 0 : i32
    %c0_i32_0 = arith.constant 0 : i32
    %c0_i32_1 = arith.constant 0 : i32
    return %c0_i32, %c0_i32_0 : i32, i32
  }
  func.func @transform_8(%arg0: i32) -> (i32, i32) {
    %c0_i32 = arith.constant 0 : i32
    %c0_i32_0 = arith.constant 0 : i32
    %c0_i32_1 = arith.constant 0 : i32
    return %c0_i32, %c0_i32_0 : i32, i32
  }
  func.func @transform_9(%arg0: i32) -> (i32, i32) {
    %c0_i32 = arith.constant 0 : i32
    %c0_i32_0 = arith.constant 0 : i32
    %c0_i32_1 = arith.constant 0 : i32
    return %c0_i32, %c0_i32_0 : i32, i32
  }
  func.func @transform_10(%arg0: i32) -> (i32, i32) {
    %c0_i32 = arith.constant 0 : i32
    %c0_i32_0 = arith.constant 0 : i32
    %c0_i32_1 = arith.constant 0 : i32
    return %c0_i32, %c0_i32_0 : i32, i32
  }
  func.func @transform_11(%arg0: i32) -> (i32, i32) {
    %c0_i32 = arith.constant 0 : i32
    %c0_i32_0 = arith.constant 0 : i32
    %c0_i32_1 = arith.constant 0 : i32
    return %c0_i32, %c0_i32_0 : i32, i32
  }
}

</mosaic_0001>

<llo_original>
// kernel: starter_block_forward.1
$region0: #{starter_block_forward.1}
  #allocation0 [shape = 'u32[]', space=smem, size = 0x4, offset = 0x4, fixed_abs, tag = 'smem constant byte address 0x4 - core index']
  #allocation1 [shape = 'u32[144,128]{1,0:T(1,128)}', space=vmem, size = 0x12000, scoped, tag = 'internal scratch']
  %s0 = inlined_call_operand.vmem [shape: bf16[16,56], index: 0, kind: input, shape index: {}]
  %s1 = inlined_call_operand.vmem [shape: bf16[56,128], index: 1, kind: input, shape index: {}]
  %s2 = inlined_call_operand.vmem [shape: f32[1,128], index: 2, kind: input, shape index: {}]
  %s3 = inlined_call_operand.vmem [shape: f32[1,128], index: 3, kind: input, shape index: {}]
  %s4 = inlined_call_operand.vmem [shape: f32[1,128], index: 4, kind: input, shape index: {}]
  %s5 = inlined_call_operand.vmem [shape: bf16[640,256], index: 5, kind: input, shape index: {}]
  %s6 = inlined_call_operand.vmem [shape: f32[1,256], index: 6, kind: input, shape index: {}]
  %s7 = inlined_call_operand.vmem [shape: f32[1,128], index: 7, kind: input, shape index: {}]
  %s8 = inlined_call_operand.vmem [shape: f32[1,128], index: 8, kind: input, shape index: {}]
  %s9 = inlined_call_operand.hbm [shape: bf16[512,128], index: 9, kind: input, shape index: {}]
  %s10 = inlined_call_operand.vmem [shape: f32[1,128], index: 10, kind: input, shape index: {}]
  %s11 = inlined_call_operand.vmem [shape: f32[16,128], index: 11, kind: output, shape index: {}]
  %s12 = sld [smem:[#allocation0]]
  $region58: #{starter_block_forward.1} parent=0
    _
  %s14 = ssub.s32 1, %s12
  %s15 = scalar_select 0, %s14, %s12
  $region1: #{starter_block_forward.1} parent=0
    #allocation2 [shape = 'u8[131072]{0}', space=vmem, size = 0x20000, scoped, tag = 'input window, operand 9, single buffered']
    #allocation3 [shape = 's32[1]{0}', space=sflag, size = 0x4, scoped, tag = 'scoped memory for starter_block_forward.1']
    %16 = vsyncpa [#allocation3], 0
    // Predicated region
    $region2: #{starter_block_forward.1} parent=1 // pred_check
      _
    $region3: #{starter_block_forward.1} parent=1 // pred_check_branch
      %18 = sbr.rel (0) target = $region5
    $region4: #{starter_block_forward.1} parent=1 // pred_region
      _
    $region5: #{starter_block_forward.1} parent=1 // pred_fallthru
      _
    // Predicated region
    $region6: #{starter_block_forward.1} parent=1 // pred_check
      _
    $region7: #{starter_block_forward.1} parent=1 // pred_check_branch
      %20 = sbr.rel (0) target = $region9
    $region8: #{starter_block_forward.1} parent=1 // pred_region
      _
    $region9: #{starter_block_forward.1} parent=1 // pred_fallthru
      _
    // Predicated region
    $region10: #{starter_block_forward.1} parent=1 // pred_check
      _
    $region11: #{starter_block_forward.1} parent=1 // pred_check_branch
      %22 = sbr.rel (0) target = $region13
    $region12: #{starter_block_forward.1} parent=1 // pred_region
      _
    $region13: #{starter_block_forward.1} parent=1 // pred_fallthru
      _
    // Predicated region
    $region14: #{starter_block_forward.1} parent=1 // pred_check
      _
    $region15: #{starter_block_forward.1} parent=1 // pred_check_branch
      %24 = sbr.rel (0) target = $region17
    $region16: #{starter_block_forward.1} parent=1 // pred_region
      _
    $region17: #{starter_block_forward.1} parent=1 // pred_fallthru
      _
    // Predicated region
    $region18: #{starter_block_forward.1} parent=1 // pred_check
      _
    $region19: #{starter_block_forward.1} parent=1 // pred_check_branch
      %26 = sbr.rel (0) target = $region21
    $region20: #{starter_block_forward.1} parent=1 // pred_region
      _
    $region21: #{starter_block_forward.1} parent=1 // pred_fallthru
      _
    // Predicated region
    $region22: #{starter_block_forward.1} parent=1 // pred_check
      _
    $region23: #{starter_block_forward.1} parent=1 // pred_check_branch
      %28 = sbr.rel (0) target = $region25
    $region24: #{starter_block_forward.1} parent=1 // pred_region
      _
    $region25: #{starter_block_forward.1} parent=1 // pred_fallthru
      _
    // Predicated region
    $region26: #{starter_block_forward.1} parent=1 // pred_check
      _
    $region27: #{starter_block_forward.1} parent=1 // pred_check_branch
      %30 = sbr.rel (0) target = $region29
    $region28: #{starter_block_forward.1} parent=1 // pred_region
      _
    $region29: #{starter_block_forward.1} parent=1 // pred_fallthru
      _
    // Predicated region
    $region30: #{starter_block_forward.1} parent=1 // pred_check
      _
    $region31: #{starter_block_forward.1} parent=1 // pred_check_branch
      %32 = sbr.rel (0) target = $region33
    $region32: #{starter_block_forward.1} parent=1 // pred_region
      _
    $region33: #{starter_block_forward.1} parent=1 // pred_fallthru
      _
    // Predicated region
    $region34: #{starter_block_forward.1} parent=1 // pred_check
      _
    $region35: #{starter_block_forward.1} parent=1 // pred_check_branch
      %34 = sbr.rel (0) target = $region37
    $region36: #{starter_block_forward.1} parent=1 // pred_region
      _
    $region37: #{starter_block_forward.1} parent=1 // pred_fallthru
      _
    // Predicated region
    $region38: #{starter_block_forward.1} parent=1 // pred_check
      _
    $region39: #{starter_block_forward.1} parent=1 // pred_check_branch
      %36 = sbr.rel (0) target = $region41
    $region40: #{starter_block_forward.1} parent=1 // pred_region
      %s38 = ssub.s32 4096, 4096
      %39 = vsyncadd [#allocation3], %s38
      %s40 = sshll.u32 [#allocation2], 4
      %s41 = int_to_ptr.vmem [resolvable:$true] %s40
      %46 = dma.hbm_to_vmem [thread:$0]  %s9, 4096, %s41, [#allocation3], 64, 64, 4
    $region41: #{starter_block_forward.1} parent=1 // pred_fallthru
      _
    // Predicated region
    $region42: #{starter_block_forward.1} parent=1 // pred_check
      _
    $region43: #{starter_block_forward.1} parent=1 // pred_check_branch
      %48 = sbr.rel (0) target = $region45
    $region44: #{starter_block_forward.1} parent=1 // pred_region
      _
    $region45: #{starter_block_forward.1} parent=1 // pred_fallthru
      _
    // Predicated region
    $region46: #{starter_block_forward.1} parent=1 // pred_check
      _
    $region47: #{starter_block_forward.1} parent=1 // pred_check_branch
      %50 = sbr.rel (0) target = $region49
    $region48: #{starter_block_forward.1} parent=1 // pred_region
      %51 = dma.done [#allocation3], 4096
    $region49: #{starter_block_forward.1} parent=1 // pred_fallthru
      _
    %v53 = vlaneseq
    %v54 = vshrl.u32 %v53, 7
    %v55 = vadd.s32 %v54, 8
    %vm56 = vcmp.lt.s32.totalorder %v54, 0
    %v57 = vsub.s32 0, %v54
    %v58 = vsel %vm56, %v57, %v54
    %v59 = vshrl.u32 %v58, 3
    %v60 = vand.u32 %v58, 7
    %v61 = vsub.s32 0, %v60
    %v62 = vsel %vm56, %v61, %v60
    %vm63 = vcmp.lt.s32.totalorder %v55, 0
    %v64 = vsub.s32 0, %v55
    %v65 = vsel %vm63, %v64, %v55
    %v66 = vshrl.u32 %v65, 3
    %v67 = vand.u32 %v65, 7
    %v68 = vsub.s32 0, %v67
    %v69 = vsel %vm63, %v68, %v67
    %vm70 = vcmp.ne.s32.totalorder %v62, 0
    %vm71 = vcmp.ne.s32.totalorder %v69, 0
    %vm72 = vcmp.lt.s32.totalorder %v62, 0
    %vm73 = vcmp.lt.s32.totalorder %v69, 0
    %vm74 = vmand %vm72, %vm70
    %vm75 = vmand %vm73, %vm71
    %v76 = vadd.s32 %v62, 8
    %v77 = vadd.s32 %v69, 8
    %v78 = vsel %vm74, %v76, %v62
    %v79 = vsel %vm75, %v77, %v69
    %v80 = vld [vmem:[%s0] sm:$0xf]
    %v81 = vld [vmem:[%s0 + $0x4] sm:$0xf]
    %v82 = vld [vmem:[%s1] sm:$0xf]
    %v83 = vld [vmem:[%s1 + $0x4] sm:$0xf]
    %v84 = vld [vmem:[%s1 + $0x8] sm:$0xf]
    %v85 = vld [vmem:[%s1 + $0xc] sm:$0xf]
    %v86 = vld [vmem:[%s1 + $0x10] sm:$0xf]
    %v87 = vld [vmem:[%s1 + $0x14] sm:$0xf]
    %v88 = vld [vmem:[%s1 + $0x18] sm:$0xf]
    %v89 = vld [vmem:[%s2] sm:$0x1]
    %v91 = vlaneseq
    %v92 = vshrl.u32 %v91, 7
    %v93 = vsub.s32 0, %v92
    %v94 = vrot.slane %v89, %v93
    %v98 = vunpack.c.l.b16 %v80
    %v99 = vunpack.c.l.b16 %v81
    %v100 = vpack.c.b16 %v99, %v98
    %v108 = vunpack.c.l.b16 %v82
    %v109 = vunpack.c.l.b16 %v83
    %v110 = vunpack.c.l.b16 %v84
    %v111 = vunpack.c.l.b16 %v85
    %v112 = vunpack.c.l.b16 %v86
    %v113 = vunpack.c.l.b16 %v87
    %v114 = vunpack.c.l.b16 %v88
    %v115 = vpack.c.b16 %v109, %v108
    %v116 = vpack.c.b16 %v111, %v110
    %v117 = vpack.c.b16 %v113, %v112
    %v118 = vpack.c.b16 %v114, %v114
    %vm122 = vcmask 457728
    %v124 = vsel %vm122, %v100, 0
    %vm126 = vcmask 1043456
    %v128 = vsel %vm126, %v118, 0
    %130 = vmatprep.subr.bf16.mxu0 0
    %131 = vmatpush1.bf16.msra.mxu0 0
    %132 = vmatprep.subr.bf16.mxu0 0
    %133 = vmatpush1.bf16.msra.mxu0 0
    %134 = vmatprep.subr.bf16.mxu0 0
    %135 = vmatpush1.bf16.msra.mxu0 0
    %136 = vmatprep.subr.bf16.mxu0 0
    %137 = vmatpush1.bf16.msra.mxu0 0
    %138 = vmatprep.subr.bf16.mxu0 0
    %139 = vmatpush1.bf16.msra.mxu0 %v128
    %140 = vmatprep.subr.bf16.mxu0 0
    %141 = vmatpush1.bf16.msra.mxu0 %v117
    %142 = vmatprep.subr.bf16.mxu0 0
    %143 = vmatpush1.bf16.msra.mxu0 %v116
    %144 = vmatprep.subr.bf16.mxu0 0
    %145 = vmatpush1.bf16.msra.mxu0 %v115
    %146 = vmatprep.subr.bf16.mxu0 0
    %147 = vmatpush2.bf16.msra.mxu0 0
    %148 = vmatprep.subr.bf16.mxu0 0
    %149 = vmatpush2.bf16.msra.mxu0 0
    %150 = vmatprep.subr.bf16.mxu0 0
    %151 = vmatpush2.bf16.msra.mxu0 0
    %152 = vmatprep.subr.bf16.mxu0 0
    %153 = vmatpush2.bf16.msra.mxu0 0
    %154 = vmatprep.subr.bf16.mxu0 0
    %155 = vmatpush2.bf16.msra.mxu0 0
    %156 = vmatprep.subr.bf16.mxu0 0
    %157 = vmatpush2.bf16.msra.mxu0 0
    %158 = vmatprep.subr.bf16.mxu0 0
    %159 = vmatpush2.bf16.msra.mxu0 0
    %160 = vmatprep.subr.bf16.mxu0 0
    %161 = vmatpush2.bf16.msra.mxu0 0
    %162 = vmatprep.mubr.bf16.mxu0 0
    %163 = vmatmul.mubr.bf16.gmra.mxu0 %v124
    %v164 = vpop.f32.mrf.mxu0
    %v165 = vadd.f32 %v94, %v164
    %v166 = vpop.f32.mrf.mxu0
    %v167 = vpop.f32.mrf.mxu0
    %v168 = vadd.f32 %v94, %v167
    %v169 = vpop.f32.mrf.mxu0
    %170 = vdwg.mxu0
    %v171 = vmax.f32 %v165, 0.0
    %v172 = vmax.f32 %v168, 0.0
    %v173 = vadd.f32 %v171, %v172
    %v174 = vrot.slane %v173, 4
    %v175 = vadd.f32 %v173, %v174
    %v176 = vrot.slane %v175, 2
    %v177 = vadd.f32 %v175, %v176
    %v178 = vrot.slane %v177, 1
    %v179 = vadd.f32 %v177, %v178
    %v180 = vrcp.pop 16.0
    %v181 = vmul.f32 %v179, %v180
    %v182 = vsub.f32 %v171, %v181
    %v183 = vsub.f32 %v172, %v181
    %v184 = vmul.f32 %v182, %v182
    %v185 = vmul.f32 %v183, %v183
    %v186 = vadd.f32 %v184, %v185
    %v187 = vrot.slane %v186, 4
    %v188 = vadd.f32 %v186, %v187
    %v189 = vrot.slane %v188, 2
    %v190 = vadd.f32 %v188, %v189
    %v191 = vrot.slane %v190, 1
    %v192 = vadd.f32 %v190, %v191
    %v193 = vmul.f32 %v192, %v180
    %v194 = vadd.f32 %v193, 1e-05
    %v195 = vrsqrt.pop %v194
    %v196 = vmul.f32 %v182, %v195
    %v197 = vmul.f32 %v183, %v195
    %v198 = vld [vmem:[%s3] sm:$0x1]
    %v200 = vlaneseq
    %v201 = vshrl.u32 %v200, 7
    %v202 = vsub.s32 0, %v201
    %v203 = vrot.slane %v198, %v202
    %v205 = vmul.f32 %v196, %v203
    %v206 = vmul.f32 %v197, %v203
    %v207 = vld [vmem:[%s4] sm:$0x1]
    %v209 = vlaneseq
    %v210 = vshrl.u32 %v209, 7
    %v211 = vsub.s32 0, %v210
    %v212 = vrot.slane %v207, %v211
    %v214 = vadd.f32 %v205, %v212
    %v215 = vadd.f32 %v206, %v212
    %v216 = vrot.slane %v214, 6
    %v217 = vrot.slane %v215, 6
    %vm218 = vcmp.lt.s32.totalorder %v54, 2
    %v219 = vsel %vm218, %v216, %v217
    %v220 = vsel %vm218, %v217, %v216
    %v221 = vadd.s32 %v78, 4294967294
    %v222 = vadd.s32 %v79, 4294967294
    %vm223 = vcmp.ge.s32.totalorder %v221, 0
    %vm224 = vcmp.ge.s32.totalorder %v222, 0
    %vm225 = vcmp.lt.s32.totalorder %v221, 8
    %vm226 = vcmp.lt.s32.totalorder %v222, 8
    %vm227 = vmand %vm223, %vm225
    %vm228 = vmand %vm224, %vm226
    %v229 = vsel %vm227, %v220, 0.0
    %v230 = vsel %vm228, %v219, 0.0
    %v231 = vpack.c.bf16 %v230, %v229
    %v232 = vrot.slane %v214, 7
    %v233 = vrot.slane %v215, 7
    %vm234 = vcmp.lt.s32.totalorder %v54, 1
    %v235 = vsel %vm234, %v232, %v233
    %v236 = vsel %vm234, %v233, %v232
    %v237 = vadd.s32 %v78, 4294967295
    %v238 = vadd.s32 %v79, 4294967295
    %vm239 = vcmp.ge.s32.totalorder %v237, 0
    %vm240 = vcmp.ge.s32.totalorder %v238, 0
    %vm241 = vcmp.lt.s32.totalorder %v237, 8
    %vm242 = vcmp.lt.s32.totalorder %v238, 8
    %vm243 = vmand %vm239, %vm241
    %vm244 = vmand %vm240, %vm242
    %v245 = vsel %vm243, %v236, 0.0
    %v246 = vsel %vm244, %v235, 0.0
    %v247 = vpack.c.bf16 %v246, %v245
    %v248 = vpack.c.bf16 %v215, %v214
    %v249 = vrot.slane %v214, 1
    %v250 = vrot.slane %v215, 1
    %vm251 = vcmp.lt.s32.totalorder %v54, 7
    %v252 = vsel %vm251, %v249, %v250
    %v253 = vsel %vm251, %v250, %v249
    %v254 = vadd.s32 %v78, 1
    %v255 = vadd.s32 %v79, 1
    %vm256 = vcmp.ge.s32.totalorder %v254, 0
    %vm257 = vcmp.ge.s32.totalorder %v255, 0
    %vm258 = vcmp.lt.s32.totalorder %v254, 8
    %vm259 = vcmp.lt.s32.totalorder %v255, 8
    %vm260 = vmand %vm256, %vm258
    %vm261 = vmand %vm257, %vm259
    %v262 = vsel %vm260, %v252, 0.0
    %v263 = vsel %vm261, %v253, 0.0
    %v264 = vpack.c.bf16 %v263, %v262
    %v265 = vrot.slane %v214, 2
    %v266 = vrot.slane %v215, 2
    %vm267 = vcmp.lt.s32.totalorder %v54, 6
    %v268 = vsel %vm267, %v265, %v266
    %v269 = vsel %vm267, %v266, %v265
    %v270 = vadd.s32 %v78, 2
    %v271 = vadd.s32 %v79, 2
    %vm272 = vcmp.ge.s32.totalorder %v270, 0
    %vm273 = vcmp.ge.s32.totalorder %v271, 0
    %vm274 = vcmp.lt.s32.totalorder %v270, 8
    %vm275 = vcmp.lt.s32.totalorder %v271, 8
    %vm276 = vmand %vm272, %vm274
    %vm277 = vmand %vm273, %vm275
    %v278 = vsel %vm276, %v268, 0.0
    %v279 = vsel %vm277, %v269, 0.0
    %v280 = vpack.c.bf16 %v279, %v278
    %v281 = vld [vmem:[%s5] sm:$0xff]
    %v282 = vld [vmem:[%s5 + $0x8] sm:$0xff]
    %v283 = vld [vmem:[%s5 + $0x10] sm:$0xff]
    %v284 = vld [vmem:[%s5 + $0x18] sm:$0xff]
    %v285 = vld [vmem:[%s5 + $0x20] sm:$0xff]
    %v286 = vld [vmem:[%s5 + $0x28] sm:$0xff]
    %v287 = vld [vmem:[%s5 + $0x30] sm:$0xff]
    %v288 = vld [vmem:[%s5 + $0x38] sm:$0xff]
    %v289 = vld [vmem:[%s5 + $0x40] sm:$0xff]
    %v290 = vld [vmem:[%s5 + $0x48] sm:$0xff]
    %v291 = vld [vmem:[%s5 + $0x50] sm:$0xff]
    %v292 = vld [vmem:[%s5 + $0x58] sm:$0xff]
    %v293 = vld [vmem:[%s5 + $0x60] sm:$0xff]
    %v294 = vld [vmem:[%s5 + $0x68] sm:$0xff]
    %v295 = vld [vmem:[%s5 + $0x70] sm:$0xff]
    %v296 = vld [vmem:[%s5 + $0x78] sm:$0xff]
    %v297 = vld [vmem:[%s5 + $0x80] sm:$0xff]
    %v298 = vld [vmem:[%s5 + $0x88] sm:$0xff]
    %v299 = vld [vmem:[%s5 + $0x90] sm:$0xff]
    %v300 = vld [vmem:[%s5 + $0x98] sm:$0xff]
    %v301 = vld [vmem:[%s5 + $0xa0] sm:$0xff]
    %v302 = vld [vmem:[%s5 + $0xa8] sm:$0xff]
    %v303 = vld [vmem:[%s5 + $0xb0] sm:$0xff]
    %v304 = vld [vmem:[%s5 + $0xb8] sm:$0xff]
    %v305 = vld [vmem:[%s5 + $0xc0] sm:$0xff]
    %v306 = vld [vmem:[%s5 + $0xc8] sm:$0xff]
    %v307 = vld [vmem:[%s5 + $0xd0] sm:$0xff]
    %v308 = vld [vmem:[%s5 + $0xd8] sm:$0xff]
    %v309 = vld [vmem:[%s5 + $0xe0] sm:$0xff]
    %v310 = vld [vmem:[%s5 + $0xe8] sm:$0xff]
    %v311 = vld [vmem:[%s5 + $0xf0] sm:$0xff]
    %v312 = vld [vmem:[%s5 + $0xf8] sm:$0xff]
    %v313 = vld [vmem:[%s5 + $0x100] sm:$0xff]
    %v314 = vld [vmem:[%s5 + $0x108] sm:$0xff]
    %v315 = vld [vmem:[%s5 + $0x110] sm:$0xff]
    %v316 = vld [vmem:[%s5 + $0x118] sm:$0xff]
    %v317 = vld [vmem:[%s5 + $0x120] sm:$0xff]
    %v318 = vld [vmem:[%s5 + $0x128] sm:$0xff]
    %v319 = vld [vmem:[%s5 + $0x130] sm:$0xff]
    %v320 = vld [vmem:[%s5 + $0x138] sm:$0xff]
    %v321 = vld [vmem:[%s5 + $0x140] sm:$0xff]
    %v322 = vld [vmem:[%s5 + $0x148] sm:$0xff]
    %v323 = vld [vmem:[%s5 + $0x150] sm:$0xff]
    %v324 = vld [vmem:[%s5 + $0x158] sm:$0xff]
    %v325 = vld [vmem:[%s5 + $0x160] sm:$0xff]
    %v326 = vld [vmem:[%s5 + $0x168] sm:$0xff]
    %v327 = vld [vmem:[%s5 + $0x170] sm:$0xff]
    %v328 = vld [vmem:[%s5 + $0x178] sm:$0xff]
    %v329 = vld [vmem:[%s5 + $0x180] sm:$0xff]
    %v330 = vld [vmem:[%s5 + $0x188] sm:$0xff]
    %v331 = vld [vmem:[%s5 + $0x190] sm:$0xff]
    %v332 = vld [vmem:[%s5 + $0x198] sm:$0xff]
    %v333 = vld [vmem:[%s5 + $0x1a0] sm:$0xff]
    %v334 = vld [vmem:[%s5 + $0x1a8] sm:$0xff]
    %v335 = vld [vmem:[%s5 + $0x1b0] sm:$0xff]
    %v336 = vld [vmem:[%s5 + $0x1b8] sm:$0xff]
    %v337 = vld [vmem:[%s5 + $0x1c0] sm:$0xff]
    %v338 = vld [vmem:[%s5 + $0x1c8] sm:$0xff]
    %v339 = vld [vmem:[%s5 + $0x1d0] sm:$0xff]
    %v340 = vld [vmem:[%s5 + $0x1d8] sm:$0xff]
    %v341 = vld [vmem:[%s5 + $0x1e0] sm:$0xff]
    %v342 = vld [vmem:[%s5 + $0x1e8] sm:$0xff]
    %v343 = vld [vmem:[%s5 + $0x1f0] sm:$0xff]
    %v344 = vld [vmem:[%s5 + $0x1f8] sm:$0xff]
    %v345 = vld [vmem:[%s5 + $0x200] sm:$0xff]
    %v346 = vld [vmem:[%s5 + $0x208] sm:$0xff]
    %v347 = vld [vmem:[%s5 + $0x210] sm:$0xff]
    %v348 = vld [vmem:[%s5 + $0x218] sm:$0xff]
    %v349 = vld [vmem:[%s5 + $0x220] sm:$0xff]
    %v350 = vld [vmem:[%s5 + $0x228] sm:$0xff]
    %v351 = vld [vmem:[%s5 + $0x230] sm:$0xff]
    %v352 = vld [vmem:[%s5 + $0x238] sm:$0xff]
    %v353 = vld [vmem:[%s5 + $0x240] sm:$0xff]
    %v354 = vld [vmem:[%s5 + $0x248] sm:$0xff]
    %v355 = vld [vmem:[%s5 + $0x250] sm:$0xff]
    %v356 = vld [vmem:[%s5 + $0x258] sm:$0xff]
    %v357 = vld [vmem:[%s5 + $0x260] sm:$0xff]
    %v358 = vld [vmem:[%s5 + $0x268] sm:$0xff]
    %v359 = vld [vmem:[%s5 + $0x270] sm:$0xff]
    %v360 = vld [vmem:[%s5 + $0x278] sm:$0xff]
    %v361 = vld [vmem:[%s6] sm:$0x3]
    %v363 = vlaneseq
    %v364 = vshrl.u32 %v363, 7
    %v365 = vsub.s32 0, %v364
    %v366 = vrot.slane %v361, %v365
    %v367 = vlaneseq
    %v368 = vshrl.u32 %v367, 7
    %v369 = vsub.s32 1, %v368
    %v370 = vrot.slane %v361, %v369
    %v453 = vunpack.c.l.b16 %v281
    %v454 = vunpack.c.h.b16 %v281
    %v455 = vunpack.c.l.b16 %v282
    %v456 = vunpack.c.h.b16 %v282
    %v457 = vunpack.c.l.b16 %v283
    %v458 = vunpack.c.h.b16 %v283
    %v459 = vunpack.c.l.b16 %v284
    %v460 = vunpack.c.h.b16 %v284
    %v461 = vunpack.c.l.b16 %v285
    %v462 = vunpack.c.h.b16 %v285
    %v463 = vunpack.c.l.b16 %v286
    %v464 = vunpack.c.h.b16 %v286
    %v465 = vunpack.c.l.b16 %v287
    %v466 = vunpack.c.h.b16 %v287
    %v467 = vunpack.c.l.b16 %v288
    %v468 = vunpack.c.h.b16 %v288
    %v469 = vunpack.c.l.b16 %v289
    %v470 = vunpack.c.h.b16 %v289
    %v471 = vunpack.c.l.b16 %v290
    %v472 = vunpack.c.h.b16 %v290
    %v473 = vunpack.c.l.b16 %v291
    %v474 = vunpack.c.h.b16 %v291
    %v475 = vunpack.c.l.b16 %v292
    %v476 = vunpack.c.h.b16 %v292
    %v477 = vunpack.c.l.b16 %v293
    %v478 = vunpack.c.h.b16 %v293
    %v479 = vunpack.c.l.b16 %v294
    %v480 = vunpack.c.h.b16 %v294
    %v481 = vunpack.c.l.b16 %v295
    %v482 = vunpack.c.h.b16 %v295
    %v483 = vunpack.c.l.b16 %v296
    %v484 = vunpack.c.h.b16 %v296
    %v485 = vunpack.c.l.b16 %v297
    %v486 = vunpack.c.h.b16 %v297
    %v487 = vunpack.c.l.b16 %v298
    %v488 = vunpack.c.h.b16 %v298
    %v489 = vunpack.c.l.b16 %v299
    %v490 = vunpack.c.h.b16 %v299
    %v491 = vunpack.c.l.b16 %v300
    %v492 = vunpack.c.h.b16 %v300
    %v493 = vunpack.c.l.b16 %v301
    %v494 = vunpack.c.h.b16 %v301
    %v495 = vunpack.c.l.b16 %v302
    %v496 = vunpack.c.h.b16 %v302
    %v497 = vunpack.c.l.b16 %v303
    %v498 = vunpack.c.h.b16 %v303
    %v499 = vunpack.c.l.b16 %v304
    %v500 = vunpack.c.h.b16 %v304
    %v501 = vunpack.c.l.b16 %v305
    %v502 = vunpack.c.h.b16 %v305
    %v503 = vunpack.c.l.b16 %v306
    %v504 = vunpack.c.h.b16 %v306
    %v505 = vunpack.c.l.b16 %v307
    %v506 = vunpack.c.h.b16 %v307
    %v507 = vunpack.c.l.b16 %v308
    %v508 = vunpack.c.h.b16 %v308
    %v509 = vunpack.c.l.b16 %v309
    %v510 = vunpack.c.h.b16 %v309
    %v511 = vunpack.c.l.b16 %v310
    %v512 = vunpack.c.h.b16 %v310
    %v513 = vunpack.c.l.b16 %v311
    %v514 = vunpack.c.h.b16 %v311
    %v515 = vunpack.c.l.b16 %v312
    %v516 = vunpack.c.h.b16 %v312
    %v517 = vunpack.c.l.b16 %v313
    %v518 = vunpack.c.h.b16 %v313
    %v519 = vunpack.c.l.b16 %v314
    %v520 = vunpack.c.h.b16 %v314
    %v521 = vunpack.c.l.b16 %v315
    %v522 = vunpack.c.h.b16 %v315
    %v523 = vunpack.c.l.b16 %v316
    %v524 = vunpack.c.h.b16 %v316
    %v525 = vunpack.c.l.b16 %v317
    %v526 = vunpack.c.h.b16 %v317
    %v527 = vunpack.c.l.b16 %v318
    %v528 = vunpack.c.h.b16 %v318
    %v529 = vunpack.c.l.b16 %v319
    %v530 = vunpack.c.h.b16 %v319
    %v531 = vunpack.c.l.b16 %v320
    %v532 = vunpack.c.h.b16 %v320
    %v533 = vunpack.c.l.b16 %v321
    %v534 = vunpack.c.h.b16 %v321
    %v535 = vunpack.c.l.b16 %v322
    %v536 = vunpack.c.h.b16 %v322
    %v537 = vunpack.c.l.b16 %v323
    %v538 = vunpack.c.h.b16 %v323
    %v539 = vunpack.c.l.b16 %v324
    %v540 = vunpack.c.h.b16 %v324
    %v541 = vunpack.c.l.b16 %v325
    %v542 = vunpack.c.h.b16 %v325
    %v543 = vunpack.c.l.b16 %v326
    %v544 = vunpack.c.h.b16 %v326
    %v545 = vunpack.c.l.b16 %v327
    %v546 = vunpack.c.h.b16 %v327
    %v547 = vunpack.c.l.b16 %v328
    %v548 = vunpack.c.h.b16 %v328
    %v549 = vunpack.c.l.b16 %v329
    %v550 = vunpack.c.h.b16 %v329
    %v551 = vunpack.c.l.b16 %v330
    %v552 = vunpack.c.h.b16 %v330
    %v553 = vunpack.c.l.b16 %v331
    %v554 = vunpack.c.h.b16 %v331
    %v555 = vunpack.c.l.b16 %v332
    %v556 = vunpack.c.h.b16 %v332
    %v557 = vunpack.c.l.b16 %v333
    %v558 = vunpack.c.h.b16 %v333
    %v559 = vunpack.c.l.b16 %v334
    %v560 = vunpack.c.h.b16 %v334
    %v561 = vunpack.c.l.b16 %v335
    %v562 = vunpack.c.h.b16 %v335
    %v563 = vunpack.c.l.b16 %v336
    %v564 = vunpack.c.h.b16 %v336
    %v565 = vunpack.c.l.b16 %v337
    %v566 = vunpack.c.h.b16 %v337
    %v567 = vunpack.c.l.b16 %v338
    %v568 = vunpack.c.h.b16 %v338
    %v569 = vunpack.c.l.b16 %v339
    %v570 = vunpack.c.h.b16 %v339
    %v571 = vunpack.c.l.b16 %v340
    %v572 = vunpack.c.h.b16 %v340
    %v573 = vunpack.c.l.b16 %v341
    %v574 = vunpack.c.h.b16 %v341
    %v575 = vunpack.c.l.b16 %v342
    %v576 = vunpack.c.h.b16 %v342
    %v577 = vunpack.c.l.b16 %v343
    %v578 = vunpack.c.h.b16 %v343
    %v579 = vunpack.c.l.b16 %v344
    %v580 = vunpack.c.h.b16 %v344
    %v581 = vunpack.c.l.b16 %v345
    %v582 = vunpack.c.h.b16 %v345
    %v583 = vunpack.c.l.b16 %v346
    %v584 = vunpack.c.h.b16 %v346
    %v585 = vunpack.c.l.b16 %v347
    %v586 = vunpack.c.h.b16 %v347
    %v587 = vunpack.c.l.b16 %v348
    %v588 = vunpack.c.h.b16 %v348
    %v589 = vunpack.c.l.b16 %v349
    %v590 = vunpack.c.h.b16 %v349
    %v591 = vunpack.c.l.b16 %v350
    %v592 = vunpack.c.h.b16 %v350
    %v593 = vunpack.c.l.b16 %v351
    %v594 = vunpack.c.h.b16 %v351
    %v595 = vunpack.c.l.b16 %v352
    %v596 = vunpack.c.h.b16 %v352
    %v597 = vunpack.c.l.b16 %v353
    %v598 = vunpack.c.h.b16 %v353
    %v599 = vunpack.c.l.b16 %v354
    %v600 = vunpack.c.h.b16 %v354
    %v601 = vunpack.c.l.b16 %v355
    %v602 = vunpack.c.h.b16 %v355
    %v603 = vunpack.c.l.b16 %v356
    %v604 = vunpack.c.h.b16 %v356
    %v605 = vunpack.c.l.b16 %v357
    %v606 = vunpack.c.h.b16 %v357
    %v607 = vunpack.c.l.b16 %v358
    %v608 = vunpack.c.h.b16 %v358
    %v609 = vunpack.c.l.b16 %v359
    %v610 = vunpack.c.h.b16 %v359
    %v611 = vunpack.c.l.b16 %v360
    %v612 = vunpack.c.h.b16 %v360
    %v613 = vpack.c.b16 %v455, %v453
    %v614 = vpack.c.b16 %v456, %v454
    %v615 = vpack.c.b16 %v459, %v457
    %v616 = vpack.c.b16 %v460, %v458
    %v617 = vpack.c.b16 %v463, %v461
    %v618 = vpack.c.b16 %v464, %v462
    %v619 = vpack.c.b16 %v467, %v465
    %v620 = vpack.c.b16 %v468, %v466
    %v621 = vpack.c.b16 %v471, %v469
    %v622 = vpack.c.b16 %v472, %v470
    %v623 = vpack.c.b16 %v475, %v473
    %v624 = vpack.c.b16 %v476, %v474
    %v625 = vpack.c.b16 %v479, %v477
    %v626 = vpack.c.b16 %v480, %v478
    %v627 = vpack.c.b16 %v483, %v481
    %v628 = vpack.c.b16 %v484, %v482
    %v629 = vpack.c.b16 %v487, %v485
    %v630 = vpack.c.b16 %v488, %v486
    %v631 = vpack.c.b16 %v491, %v489
    %v632 = vpack.c.b16 %v492, %v490
    %v633 = vpack.c.b16 %v495, %v493
    %v634 = vpack.c.b16 %v496, %v494
    %v635 = vpack.c.b16 %v499, %v497
    %v636 = vpack.c.b16 %v500, %v498
    %v637 = vpack.c.b16 %v503, %v501
    %v638 = vpack.c.b16 %v504, %v502
    %v639 = vpack.c.b16 %v507, %v505
    %v640 = vpack.c.b16 %v508, %v506
    %v641 = vpack.c.b16 %v511, %v509
    %v642 = vpack.c.b16 %v512, %v510
    %v643 = vpack.c.b16 %v515, %v513
    %v644 = vpack.c.b16 %v516, %v514
    %v645 = vpack.c.b16 %v519, %v517
    %v646 = vpack.c.b16 %v520, %v518
    %v647 = vpack.c.b16 %v523, %v521
    %v648 = vpack.c.b16 %v524, %v522
    %v649 = vpack.c.b16 %v527, %v525
    %v650 = vpack.c.b16 %v528, %v526
    %v651 = vpack.c.b16 %v531, %v529
    %v652 = vpack.c.b16 %v532, %v530
    %v653 = vpack.c.b16 %v535, %v533
    %v654 = vpack.c.b16 %v536, %v534
    %v655 = vpack.c.b16 %v539, %v537
    %v656 = vpack.c.b16 %v540, %v538
    %v657 = vpack.c.b16 %v543, %v541
    %v658 = vpack.c.b16 %v544, %v542
    %v659 = vpack.c.b16 %v547, %v545
    %v660 = vpack.c.b16 %v548, %v546
    %v661 = vpack.c.b16 %v551, %v549
    %v662 = vpack.c.b16 %v552, %v550
    %v663 = vpack.c.b16 %v555, %v553
    %v664 = vpack.c.b16 %v556, %v554
    %v665 = vpack.c.b16 %v559, %v557
    %v666 = vpack.c.b16 %v560, %v558
    %v667 = vpack.c.b16 %v563, %v561
    %v668 = vpack.c.b16 %v564, %v562
    %v669 = vpack.c.b16 %v567, %v565
    %v670 = vpack.c.b16 %v568, %v566
    %v671 = vpack.c.b16 %v571, %v569
    %v672 = vpack.c.b16 %v572, %v570
    %v673 = vpack.c.b16 %v575, %v573
    %v674 = vpack.c.b16 %v576, %v574
    %v675 = vpack.c.b16 %v579, %v577
    %v676 = vpack.c.b16 %v580, %v578
    %v677 = vpack.c.b16 %v583, %v581
    %v678 = vpack.c.b16 %v584, %v582
    %v679 = vpack.c.b16 %v587, %v585
    %v680 = vpack.c.b16 %v588, %v586
    %v681 = vpack.c.b16 %v591, %v589
    %v682 = vpack.c.b16 %v592, %v590
    %v683 = vpack.c.b16 %v595, %v593
    %v684 = vpack.c.b16 %v596, %v594
    %v685 = vpack.c.b16 %v599, %v597
    %v686 = vpack.c.b16 %v600, %v598
    %v687 = vpack.c.b16 %v603, %v601
    %v688 = vpack.c.b16 %v604, %v602
    %v689 = vpack.c.b16 %v607, %v605
    %v690 = vpack.c.b16 %v608, %v606
    %v691 = vpack.c.b16 %v611, %v609
    %v692 = vpack.c.b16 %v612, %v610
    %773 = vmatprep.subr.bf16.mxu0 %v628
    %774 = vmatpush1.bf16.msra.mxu0 %v627
    %775 = vmatprep.subr.bf16.mxu0 %v626
    %776 = vmatpush1.bf16.msra.mxu0 %v625
    %777 = vmatprep.subr.bf16.mxu0 %v624
    %778 = vmatpush1.bf16.msra.mxu0 %v623
    %779 = vmatprep.subr.bf16.mxu0 %v622
    %780 = vmatpush1.bf16.msra.mxu0 %v621
    %781 = vmatprep.subr.bf16.mxu0 %v620
    %782 = vmatpush1.bf16.msra.mxu0 %v619
    %783 = vmatprep.subr.bf16.mxu0 %v618
    %784 = vmatpush1.bf16.msra.mxu0 %v617
    %785 = vmatprep.subr.bf16.mxu0 %v616
    %786 = vmatpush1.bf16.msra.mxu0 %v615
    %787 = vmatprep.subr.bf16.mxu0 %v614
    %788 = vmatpush1.bf16.msra.mxu0 %v613
    %789 = vmatprep.subr.bf16.mxu0 %v644
    %790 = vmatpush2.bf16.msra.mxu0 %v643
    %791 = vmatprep.subr.bf16.mxu0 %v642
    %792 = vmatpush2.bf16.msra.mxu0 %v641
    %793 = vmatprep.subr.bf16.mxu0 %v640
    %794 = vmatpush2.bf16.msra.mxu0 %v639
    %795 = vmatprep.subr.bf16.mxu0 %v638
    %796 = vmatpush2.bf16.msra.mxu0 %v637
    %797 = vmatprep.subr.bf16.mxu0 %v636
    %798 = vmatpush2.bf16.msra.mxu0 %v635
    %799 = vmatprep.subr.bf16.mxu0 %v634
    %800 = vmatpush2.bf16.msra.mxu0 %v633
    %801 = vmatprep.subr.bf16.mxu0 %v632
    %802 = vmatpush2.bf16.msra.mxu0 %v631
    %803 = vmatprep.subr.bf16.mxu0 %v630
    %804 = vmatpush2.bf16.msra.mxu0 %v629
    %805 = vmatprep.mubr.bf16.mxu0 %v247
    %806 = vmatmul.mubr.bf16.gmra.mxu0 %v231
    %v807 = vpop.f32.mrf.mxu0
    %v808 = vadd.f32 %v366, %v807
    %v809 = vpop.f32.mrf.mxu0
    %v810 = vadd.f32 %v370, %v809
    %v811 = vpop.f32.mrf.mxu0
    %v812 = vadd.f32 %v366, %v811
    %v813 = vpop.f32.mrf.mxu0
    %v814 = vadd.f32 %v370, %v813
    %815 = vdwg.mxu0
    %816 = vmatprep.subr.bf16.mxu0 %v660
    %817 = vmatpush1.bf16.msra.mxu0 %v659
    %818 = vmatprep.subr.bf16.mxu0 %v658
    %819 = vmatpush1.bf16.msra.mxu0 %v657
    %820 = vmatprep.subr.bf16.mxu0 %v656
    %821 = vmatpush1.bf16.msra.mxu0 %v655
    %822 = vmatprep.subr.bf16.mxu0 %v654
    %823 = vmatpush1.bf16.msra.mxu0 %v653
    %824 = vmatprep.subr.bf16.mxu0 %v652
    %825 = vmatpush1.bf16.msra.mxu0 %v651
    %826 = vmatprep.subr.bf16.mxu0 %v650
    %827 = vmatpush1.bf16.msra.mxu0 %v649
    %828 = vmatprep.subr.bf16.mxu0 %v648
    %829 = vmatpush1.bf16.msra.mxu0 %v647
    %830 = vmatprep.subr.bf16.mxu0 %v646
    %831 = vmatpush1.bf16.msra.mxu0 %v645
    %832 = vmatprep.subr.bf16.mxu0 %v676
    %833 = vmatpush2.bf16.msra.mxu0 %v675
    %834 = vmatprep.subr.bf16.mxu0 %v674
    %835 = vmatpush2.bf16.msra.mxu0 %v673
    %836 = vmatprep.subr.bf16.mxu0 %v672
    %837 = vmatpush2.bf16.msra.mxu0 %v671
    %838 = vmatprep.subr.bf16.mxu0 %v670
    %839 = vmatpush2.bf16.msra.mxu0 %v669
    %840 = vmatprep.subr.bf16.mxu0 %v668
    %841 = vmatpush2.bf16.msra.mxu0 %v667
    %842 = vmatprep.subr.bf16.mxu0 %v666
    %843 = vmatpush2.bf16.msra.mxu0 %v665
    %844 = vmatprep.subr.bf16.mxu0 %v664
    %845 = vmatpush2.bf16.msra.mxu0 %v663
    %846 = vmatprep.subr.bf16.mxu0 %v662
    %847 = vmatpush2.bf16.msra.mxu0 %v661
    %848 = vmatprep.mubr.bf16.mxu0 %v264
    %849 = vmatmul.mubr.bf16.gmra.mxu0 %v248
    %v850 = vpop.f32.mrf.mxu0
    %v851 = vadd.f32 %v808, %v850
    %v852 = vpop.f32.mrf.mxu0
    %v853 = vadd.f32 %v810, %v852
    %v854 = vpop.f32.mrf.mxu0
    %v855 = vadd.f32 %v812, %v854
    %v856 = vpop.f32.mrf.mxu0
    %v857 = vadd.f32 %v814, %v856
    %858 = vdwg.mxu0
    %859 = vmatprep.subr.bf16.mxu0 %v692
    %860 = vmatpush1.bf16.msra.mxu0 %v691
    %861 = vmatprep.subr.bf16.mxu0 %v690
    %862 = vmatpush1.bf16.msra.mxu0 %v689
    %863 = vmatprep.subr.bf16.mxu0 %v688
    %864 = vmatpush1.bf16.msra.mxu0 %v687
    %865 = vmatprep.subr.bf16.mxu0 %v686
    %866 = vmatpush1.bf16.msra.mxu0 %v685
    %867 = vmatprep.subr.bf16.mxu0 %v684
    %868 = vmatpush1.bf16.msra.mxu0 %v683
    %869 = vmatprep.subr.bf16.mxu0 %v682
    %870 = vmatpush1.bf16.msra.mxu0 %v681
    %871 = vmatprep.subr.bf16.mxu0 %v680
    %872 = vmatpush1.bf16.msra.mxu0 %v679
    %873 = vmatprep.subr.bf16.mxu0 %v678
    %874 = vmatpush1.bf16.msra.mxu0 %v677
    %875 = vmatprep.subr.bf16.mxu0 0
    %876 = vmatpush2.bf16.msra.mxu0 0
    %877 = vmatprep.subr.bf16.mxu0 0
    %878 = vmatpush2.bf16.msra.mxu0 0
    %879 = vmatprep.subr.bf16.mxu0 0
    %880 = vmatpush2.bf16.msra.mxu0 0
    %881 = vmatprep.subr.bf16.mxu0 0
    %882 = vmatpush2.bf16.msra.mxu0 0
    %883 = vmatprep.subr.bf16.mxu0 0
    %884 = vmatpush2.bf16.msra.mxu0 0
    %885 = vmatprep.subr.bf16.mxu0 0
    %886 = vmatpush2.bf16.msra.mxu0 0
    %887 = vmatprep.subr.bf16.mxu0 0
    %888 = vmatpush2.bf16.msra.mxu0 0
    %889 = vmatprep.subr.bf16.mxu0 0
    %890 = vmatpush2.bf16.msra.mxu0 0
    %891 = vmatprep.mubr.bf16.mxu0 0
    %892 = vmatmul.mubr.bf16.gmra.mxu0 %v280
    %v893 = vpop.f32.mrf.mxu0
    %v894 = vadd.f32 %v851, %v893
    %v895 = vpop.f32.mrf.mxu0
    %v896 = vadd.f32 %v853, %v895
    %v897 = vpop.f32.mrf.mxu0
    %v898 = vadd.f32 %v855, %v897
    %v899 = vpop.f32.mrf.mxu0
    %v900 = vadd.f32 %v857, %v899
    %901 = vdwg.mxu0
    %v902 = vmax.f32 %v894, 0.0
    %v903 = vmax.f32 %v896, 0.0
    %v904 = vmax.f32 %v898, 0.0
    %v905 = vmax.f32 %v900, 0.0
    %v906 = vadd.f32 %v902, %v904
    %v907 = vrot.slane %v906, 4
    %v908 = vadd.f32 %v906, %v907
    %v909 = vrot.slane %v908, 2
    %v910 = vadd.f32 %v908, %v909
    %v911 = vrot.slane %v910, 1
    %v912 = vadd.f32 %v910, %v911
    %v913 = vadd.f32 %v903, %v905
    %v914 = vrot.slane %v913, 4
    %v915 = vadd.f32 %v913, %v914
    %v916 = vrot.slane %v915, 2
    %v917 = vadd.f32 %v915, %v916
    %v918 = vrot.slane %v917, 1
    %v919 = vadd.f32 %v917, %v918
    %v920 = vadd.f32 %v912, %v919
    %v921 = vrcp.pop 32.0
    %v922 = vmul.f32 %v920, %v921
    %v923 = vsub.f32 %v902, %v922
    %v924 = vsub.f32 %v904, %v922
    %v925 = vsub.f32 %v903, %v922
    %v926 = vsub.f32 %v905, %v922
    %v927 = vmul.f32 %v923, %v923
    %v928 = vmul.f32 %v924, %v924
    %v929 = vadd.f32 %v927, %v928
    %v930 = vrot.slane %v929, 4
    %v931 = vadd.f32 %v929, %v930
    %v932 = vrot.slane %v931, 2
    %v933 = vadd.f32 %v931, %v932
    %v934 = vrot.slane %v933, 1
    %v935 = vadd.f32 %v933, %v934
    %v936 = vmul.f32 %v925, %v925
    %v937 = vmul.f32 %v926, %v926
    %v938 = vadd.f32 %v936, %v937
    %v939 = vrot.slane %v938, 4
    %v940 = vadd.f32 %v938, %v939
    %v941 = vrot.slane %v940, 2
    %v942 = vadd.f32 %v940, %v941
    %v943 = vrot.slane %v942, 1
    %v944 = vadd.f32 %v942, %v943
    %v945 = vadd.f32 %v935, %v944
    %v946 = vmul.f32 %v945, %v921
    %v947 = vadd.f32 %v946, 1e-05
    %v948 = vrsqrt.pop %v947
    %v949 = vld [vmem:[%s7] sm:$0x1]
    %v950 = vmul.f32 %v948, %v949
    %v951 = vlaneseq
    %v952 = vshrl.u32 %v951, 7
    %v953 = vsub.s32 0, %v952
    %v954 = vrot.slane %v950, %v953
    %v955 = vmul.f32 %v923, %v954
    %v956 = vmul.f32 %v924, %v954
    %v957 = vld [vmem:[%s8] sm:$0x1]
    %v959 = vlaneseq
    %v960 = vshrl.u32 %v959, 7
    %v961 = vsub.s32 0, %v960
    %v962 = vrot.slane %v957, %v961
    %v964 = vadd.f32 %v955, %v962
    %v965 = vadd.f32 %v956, %v962
    %v966 = vmul.f32 %v925, %v954
    %v967 = vmul.f32 %v926, %v954
    %v968 = vadd.f32 %v966, %v962
    %v969 = vadd.f32 %v967, %v962
    %v970 = vrot.slane %v968, 7
    %v971 = vrot.slane %v969, 7
    %v972 = vsel %vm234, %v970, %v971
    %v973 = vsel %vm234, %v971, %v970
    %v974 = vsel %vm243, %v973, 0.0
    %v975 = vsel %vm244, %v972, 0.0
    %v976 = vpack.c.bf16 %v975, %v974
    %v977 = vpack.c.bf16 %v965, %v964
    %v978 = vpack.c.bf16 %v969, %v968
    %v979 = vrot.slane %v964, 1
    %v980 = vrot.slane %v965, 1
    %v981 = vsel %vm251, %v979, %v980
    %v982 = vsel %vm251, %v980, %v979
    %v983 = vsel %vm260, %v981, 0.0
    %v984 = vsel %vm261, %v982, 0.0
    %v985 = vpack.c.bf16 %v984, %v983
    %v986 = vld [vmem:[#allocation2] sm:$0xf]
    %v987 = vld [vmem:[#allocation2 + $0x4] sm:$0xf]
    %v988 = vld [vmem:[#allocation2 + $0x8] sm:$0xf]
    %v989 = vld [vmem:[#allocation2 + $0xc] sm:$0xf]
    %v990 = vld [vmem:[#allocation2 + $0x10] sm:$0xf]
    %v991 = vld [vmem:[#allocation2 + $0x14] sm:$0xf]
    %v992 = vld [vmem:[#allocation2 + $0x18] sm:$0xf]
    %v993 = vld [vmem:[#allocation2 + $0x1c] sm:$0xf]
    %v994 = vld [vmem:[#allocation2 + $0x20] sm:$0xf]
    %v995 = vld [vmem:[#allocation2 + $0x24] sm:$0xf]
    %v996 = vld [vmem:[#allocation2 + $0x28] sm:$0xf]
    %v997 = vld [vmem:[#allocation2 + $0x2c] sm:$0xf]
    %v998 = vld [vmem:[#allocation2 + $0x30] sm:$0xf]
    %v999 = vld [vmem:[#allocation2 + $0x34] sm:$0xf]
    %v1000 = vld [vmem:[#allocation2 + $0x38] sm:$0xf]
    %v1001 = vld [vmem:[#allocation2 + $0x3c] sm:$0xf]
    %v1002 = vld [vmem:[#allocation2 + $0x40] sm:$0xf]
    %v1003 = vld [vmem:[#allocation2 + $0x44] sm:$0xf]
    %v1004 = vld [vmem:[#allocation2 + $0x48] sm:$0xf]
    %v1005 = vld [vmem:[#allocation2 + $0x4c] sm:$0xf]
    %v1006 = vld [vmem:[#allocation2 + $0x50] sm:$0xf]
    %v1007 = vld [vmem:[#allocation2 + $0x54] sm:$0xf]
    %v1008 = vld [vmem:[#allocation2 + $0x58] sm:$0xf]
    %v1009 = vld [vmem:[#allocation2 + $0x5c] sm:$0xf]
    %v1010 = vld [vmem:[#allocation2 + $0x60] sm:$0xf]
    %v1011 = vld [vmem:[#allocation2 + $0x64] sm:$0xf]
    %v1012 = vld [vmem:[#allocation2 + $0x68] sm:$0xf]
    %v1013 = vld [vmem:[#allocation2 + $0x6c] sm:$0xf]
    %v1014 = vld [vmem:[#allocation2 + $0x70] sm:$0xf]
    %v1015 = vld [vmem:[#allocation2 + $0x74] sm:$0xf]
    %v1016 = vld [vmem:[#allocation2 + $0x78] sm:$0xf]
    %v1017 = vld [vmem:[#allocation2 + $0x7c] sm:$0xf]
    %v1018 = vld [vmem:[#allocation2 + $0x80] sm:$0xf]
    %v1019 = vld [vmem:[#allocation2 + $0x84] sm:$0xf]
    %v1020 = vld [vmem:[#allocation2 + $0x88] sm:$0xf]
    %v1021 = vld [vmem:[#allocation2 + $0x8c] sm:$0xf]
    %v1022 = vld [vmem:[#allocation2 + $0x90] sm:$0xf]
    %v1023 = vld [vmem:[#allocation2 + $0x94] sm:$0xf]
    %v1024 = vld [vmem:[#allocation2 + $0x98] sm:$0xf]
    %v1025 = vld [vmem:[#allocation2 + $0x9c] sm:$0xf]
    %v1026 = vld [vmem:[#allocation2 + $0xa0] sm:$0xf]
    %v1027 = vld [vmem:[#allocation2 + $0xa4] sm:$0xf]
    %v1028 = vld [vmem:[#allocation2 + $0xa8] sm:$0xf]
    %v1029 = vld [vmem:[#allocation2 + $0xac] sm:$0xf]
    %v1030 = vld [vmem:[#allocation2 + $0xb0] sm:$0xf]
    %v1031 = vld [vmem:[#allocation2 + $0xb4] sm:$0xf]
    %v1032 = vld [vmem:[#allocation2 + $0xb8] sm:$0xf]
    %v1033 = vld [vmem:[#allocation2 + $0xbc] sm:$0xf]
    %v1034 = vld [vmem:[#allocation2 + $0xc0] sm:$0xf]
    %v1035 = vld [vmem:[#allocation2 + $0xc4] sm:$0xf]
    %v1036 = vld [vmem:[#allocation2 + $0xc8] sm:$0xf]
    %v1037 = vld [vmem:[#allocation2 + $0xcc] sm:$0xf]
    %v1038 = vld [vmem:[#allocation2 + $0xd0] sm:$0xf]
    %v1039 = vld [vmem:[#allocation2 + $0xd4] sm:$0xf]
    %v1040 = vld [vmem:[#allocation2 + $0xd8] sm:$0xf]
    %v1041 = vld [vmem:[#allocation2 + $0xdc] sm:$0xf]
    %v1042 = vld [vmem:[#allocation2 + $0xe0] sm:$0xf]
    %v1043 = vld [vmem:[#allocation2 + $0xe4] sm:$0xf]
    %v1044 = vld [vmem:[#allocation2 + $0xe8] sm:$0xf]
    %v1045 = vld [vmem:[#allocation2 + $0xec] sm:$0xf]
    %v1046 = vld [vmem:[#allocation2 + $0xf0] sm:$0xf]
    %v1047 = vld [vmem:[#allocation2 + $0xf4] sm:$0xf]
    %v1048 = vld [vmem:[#allocation2 + $0xf8] sm:$0xf]
    %v1049 = vld [vmem:[#allocation2 + $0xfc] sm:$0xf]
    %v1050 = vld [vmem:[%s10] sm:$0x1]
    %v1052 = vlaneseq
    %v1053 = vshrl.u32 %v1052, 7
    %v1054 = vsub.s32 0, %v1053
    %v1055 = vrot.slane %v1050, %v1054
    %v1121 = vunpack.c.l.b16 %v986
    %v1122 = vunpack.c.l.b16 %v987
    %v1123 = vunpack.c.l.b16 %v988
    %v1124 = vunpack.c.l.b16 %v989
    %v1125 = vunpack.c.l.b16 %v990
    %v1126 = vunpack.c.l.b16 %v991
    %v1127 = vunpack.c.l.b16 %v992
    %v1128 = vunpack.c.l.b16 %v993
    %v1129 = vunpack.c.l.b16 %v994
    %v1130 = vunpack.c.l.b16 %v995
    %v1131 = vunpack.c.l.b16 %v996
    %v1132 = vunpack.c.l.b16 %v997
    %v1133 = vunpack.c.l.b16 %v998
    %v1134 = vunpack.c.l.b16 %v999
    %v1135 = vunpack.c.l.b16 %v1000
    %v1136 = vunpack.c.l.b16 %v1001
    %v1137 = vunpack.c.l.b16 %v1002
    %v1138 = vunpack.c.l.b16 %v1003
    %v1139 = vunpack.c.l.b16 %v1004
    %v1140 = vunpack.c.l.b16 %v1005
    %v1141 = vunpack.c.l.b16 %v1006
    %v1142 = vunpack.c.l.b16 %v1007
    %v1143 = vunpack.c.l.b16 %v1008
    %v1144 = vunpack.c.l.b16 %v1009
    %v1145 = vunpack.c.l.b16 %v1010
    %v1146 = vunpack.c.l.b16 %v1011
    %v1147 = vunpack.c.l.b16 %v1012
    %v1148 = vunpack.c.l.b16 %v1013
    %v1149 = vunpack.c.l.b16 %v1014
    %v1150 = vunpack.c.l.b16 %v1015
    %v1151 = vunpack.c.l.b16 %v1016
    %v1152 = vunpack.c.l.b16 %v1017
    %v1153 = vunpack.c.l.b16 %v1018
    %v1154 = vunpack.c.l.b16 %v1019
    %v1155 = vunpack.c.l.b16 %v1020
    %v1156 = vunpack.c.l.b16 %v1021
    %v1157 = vunpack.c.l.b16 %v1022
    %v1158 = vunpack.c.l.b16 %v1023
    %v1159 = vunpack.c.l.b16 %v1024
    %v1160 = vunpack.c.l.b16 %v1025
    %v1161 = vunpack.c.l.b16 %v1026
    %v1162 = vunpack.c.l.b16 %v1027
    %v1163 = vunpack.c.l.b16 %v1028
    %v1164 = vunpack.c.l.b16 %v1029
    %v1165 = vunpack.c.l.b16 %v1030
    %v1166 = vunpack.c.l.b16 %v1031
    %v1167 = vunpack.c.l.b16 %v1032
    %v1168 = vunpack.c.l.b16 %v1033
    %v1169 = vunpack.c.l.b16 %v1034
    %v1170 = vunpack.c.l.b16 %v1035
    %v1171 = vunpack.c.l.b16 %v1036
    %v1172 = vunpack.c.l.b16 %v1037
    %v1173 = vunpack.c.l.b16 %v1038
    %v1174 = vunpack.c.l.b16 %v1039
    %v1175 = vunpack.c.l.b16 %v1040
    %v1176 = vunpack.c.l.b16 %v1041
    %v1177 = vunpack.c.l.b16 %v1042
    %v1178 = vunpack.c.l.b16 %v1043
    %v1179 = vunpack.c.l.b16 %v1044
    %v1180 = vunpack.c.l.b16 %v1045
    %v1181 = vunpack.c.l.b16 %v1046
    %v1182 = vunpack.c.l.b16 %v1047
    %v1183 = vunpack.c.l.b16 %v1048
    %v1184 = vunpack.c.l.b16 %v1049
    %v1185 = vpack.c.b16 %v1122, %v1121
    %v1186 = vpack.c.b16 %v1124, %v1123
    %v1187 = vpack.c.b16 %v1126, %v1125
    %v1188 = vpack.c.b16 %v1128, %v1127
    %v1189 = vpack.c.b16 %v1130, %v1129
    %v1190 = vpack.c.b16 %v1132, %v1131
    %v1191 = vpack.c.b16 %v1134, %v1133
    %v1192 = vpack.c.b16 %v1136, %v1135
    %v1193 = vpack.c.b16 %v1138, %v1137
    %v1194 = vpack.c.b16 %v1140, %v1139
    %v1195 = vpack.c.b16 %v1142, %v1141
    %v1196 = vpack.c.b16 %v1144, %v1143
    %v1197 = vpack.c.b16 %v1146, %v1145
    %v1198 = vpack.c.b16 %v1148, %v1147
    %v1199 = vpack.c.b16 %v1150, %v1149
    %v1200 = vpack.c.b16 %v1152, %v1151
    %v1201 = vpack.c.b16 %v1154, %v1153
    %v1202 = vpack.c.b16 %v1156, %v1155
    %v1203 = vpack.c.b16 %v1158, %v1157
    %v1204 = vpack.c.b16 %v1160, %v1159
    %v1205 = vpack.c.b16 %v1162, %v1161
    %v1206 = vpack.c.b16 %v1164, %v1163
    %v1207 = vpack.c.b16 %v1166, %v1165
    %v1208 = vpack.c.b16 %v1168, %v1167
    %v1209 = vpack.c.b16 %v1170, %v1169
    %v1210 = vpack.c.b16 %v1172, %v1171
    %v1211 = vpack.c.b16 %v1174, %v1173
    %v1212 = vpack.c.b16 %v1176, %v1175
    %v1213 = vpack.c.b16 %v1178, %v1177
    %v1214 = vpack.c.b16 %v1180, %v1179
    %v1215 = vpack.c.b16 %v1182, %v1181
    %v1216 = vpack.c.b16 %v1184, %v1183
    %1249 = vmatprep.subr.bf16.mxu0 0
    %1250 = vmatpush1.bf16.msra.mxu0 %v1192
    %1251 = vmatprep.subr.bf16.mxu0 0
    %1252 = vmatpush1.bf16.msra.mxu0 %v1191
    %1253 = vmatprep.subr.bf16.mxu0 0
    %1254 = vmatpush1.bf16.msra.mxu0 %v1190
    %1255 = vmatprep.subr.bf16.mxu0 0
    %1256 = vmatpush1.bf16.msra.mxu0 %v1189
    %1257 = vmatprep.subr.bf16.mxu0 0
    %1258 = vmatpush1.bf16.msra.mxu0 %v1188
    %1259 = vmatprep.subr.bf16.mxu0 0
    %1260 = vmatpush1.bf16.msra.mxu0 %v1187
    %1261 = vmatprep.subr.bf16.mxu0 0
    %1262 = vmatpush1.bf16.msra.mxu0 %v1186
    %1263 = vmatprep.subr.bf16.mxu0 0
    %1264 = vmatpush1.bf16.msra.mxu0 %v1185
    %1265 = vmatprep.subr.bf16.mxu0 0
    %1266 = vmatpush2.bf16.msra.mxu0 %v1200
    %1267 = vmatprep.subr.bf16.mxu0 0
    %1268 = vmatpush2.bf16.msra.mxu0 %v1199
    %1269 = vmatprep.subr.bf16.mxu0 0
    %1270 = vmatpush2.bf16.msra.mxu0 %v1198
    %1271 = vmatprep.subr.bf16.mxu0 0
    %1272 = vmatpush2.bf16.msra.mxu0 %v1197
    %1273 = vmatprep.subr.bf16.mxu0 0
    %1274 = vmatpush2.bf16.msra.mxu0 %v1196
    %1275 = vmatprep.subr.bf16.mxu0 0
    %1276 = vmatpush2.bf16.msra.mxu0 %v1195
    %1277 = vmatprep.subr.bf16.mxu0 0
    %1278 = vmatpush2.bf16.msra.mxu0 %v1194
    %1279 = vmatprep.subr.bf16.mxu0 0
    %1280 = vmatpush2.bf16.msra.mxu0 %v1193
    %1281 = vmatprep.mubr.bf16.mxu0 %v977
    %1282 = vmatmul.mubr.bf16.gmra.mxu0 %v976
    %v1283 = vpop.f32.mrf.mxu0
    %v1284 = vadd.f32 %v1055, %v1283
    %v1285 = vpop.f32.mrf.mxu0
    %v1286 = vpop.f32.mrf.mxu0
    %v1287 = vadd.f32 %v1055, %v1286
    %v1288 = vpop.f32.mrf.mxu0
    %1289 = vdwg.mxu0
    %1290 = vmatprep.subr.bf16.mxu0 0
    %1291 = vmatpush1.bf16.msra.mxu0 %v1208
    %1292 = vmatprep.subr.bf16.mxu0 0
    %1293 = vmatpush1.bf16.msra.mxu0 %v1207
    %1294 = vmatprep.subr.bf16.mxu0 0
    %1295 = vmatpush1.bf16.msra.mxu0 %v1206
    %1296 = vmatprep.subr.bf16.mxu0 0
    %1297 = vmatpush1.bf16.msra.mxu0 %v1205
    %1298 = vmatprep.subr.bf16.mxu0 0
    %1299 = vmatpush1.bf16.msra.mxu0 %v1204
    %1300 = vmatprep.subr.bf16.mxu0 0
    %1301 = vmatpush1.bf16.msra.mxu0 %v1203
    %1302 = vmatprep.subr.bf16.mxu0 0
    %1303 = vmatpush1.bf16.msra.mxu0 %v1202
    %1304 = vmatprep.subr.bf16.mxu0 0
    %1305 = vmatpush1.bf16.msra.mxu0 %v1201
    %1306 = vmatprep.subr.bf16.mxu0 0
    %1307 = vmatpush2.bf16.msra.mxu0 %v1216
    %1308 = vmatprep.subr.bf16.mxu0 0
    %1309 = vmatpush2.bf16.msra.mxu0 %v1215
    %1310 = vmatprep.subr.bf16.mxu0 0
    %1311 = vmatpush2.bf16.msra.mxu0 %v1214
    %1312 = vmatprep.subr.bf16.mxu0 0
    %1313 = vmatpush2.bf16.msra.mxu0 %v1213
    %1314 = vmatprep.subr.bf16.mxu0 0
    %1315 = vmatpush2.bf16.msra.mxu0 %v1212
    %1316 = vmatprep.subr.bf16.mxu0 0
    %1317 = vmatpush2.bf16.msra.mxu0 %v1211
    %1318 = vmatprep.subr.bf16.mxu0 0
    %1319 = vmatpush2.bf16.msra.mxu0 %v1210
    %1320 = vmatprep.subr.bf16.mxu0 0
    %1321 = vmatpush2.bf16.msra.mxu0 %v1209
    %1322 = vmatprep.mubr.bf16.mxu0 %v985
    %1323 = vmatmul.mubr.bf16.gmra.mxu0 %v978
    %v1324 = vpop.f32.mrf.mxu0
    %v1325 = vadd.f32 %v1284, %v1324
    %v1326 = vpop.f32.mrf.mxu0
    %v1327 = vpop.f32.mrf.mxu0
    %v1328 = vadd.f32 %v1287, %v1327
    %v1329 = vpop.f32.mrf.mxu0
    %1330 = vdwg.mxu0
    %1331 = vst [vmem:[%s11] sm:$0xff] %v1325
    %1332 = vst [vmem:[%s11 + $0x8] sm:$0xff] %v1328
    // Predicated region
    $region50: #{starter_block_forward.1} parent=1 // pred_check
      _
    $region51: #{starter_block_forward.1} parent=1 // pred_check_branch
      %1334 = sbr.rel (0) target = $region53
    $region52: #{starter_block_forward.1} parent=1 // pred_region
      _
    $region53: #{starter_block_forward.1} parent=1 // pred_fallthru
      _
    // Predicated region
    $region54: #{starter_block_forward.1} parent=1 // pred_check
      _
    $region55: #{starter_block_forward.1} parent=1 // pred_check_branch
      %1336 = sbr.rel (0) target = $region57
    $region56: #{starter_block_forward.1} parent=1 // pred_region
      _
    $region57: #{starter_block_forward.1} parent=1 // pred_fallthru
      _
    %1337 = vsyncpa [#allocation3], 1

</llo_original>
